<compile_context>
chip_gen: v7x
topology: tpu7x:2x2x1
jax: 0.10.0
libtpu: 0.0.40
codegen_flags: <defaults>
</compile_context>

<pallas_src>
import functools

import jax
import jax.numpy as jnp
from jax.experimental import pallas as pl
from jax.experimental.pallas import tpu as pltpu

W = 32
K_TOTAL = W ** 3            # 32768 voxel-grid codebook entries
TM_MAX = 1024               # point-axis tile width for the index kernel
VOX_ROWS = 16               # voxel laid out (B, 16, 2048): sublane-dense block
VOX_COLS = K_TOTAL // VOX_ROWS


def _round_up(n, m):
    return ((n + m - 1) // m) * m


def make_grid_points(w: int = W) -> jnp.ndarray:
    """Equivalent of `meshgrid(w)` in the PyTorch module: voxel centers in
    [-1, 1], flattened to (w^3, 3) in C order (idx = i*w*w + j*w + k)."""
    r = jnp.arange(w, dtype=jnp.float32)
    gi, gj, gk = jnp.meshgrid(r, r, r, indexing="ij")
    grid = jnp.stack([gi, gj, gk], axis=0)                     # (3, w, w, w)
    return ((grid + 0.5) * 2.0 / w - 1.0).reshape(3, -1).T     # (w^3, 3)


# ---------------------------------------------------------------------------
# Kernel 1: analytic nearest-voxel-center index (pure VPU, no matmul/argmin)
# ---------------------------------------------------------------------------
def _index_kernel(x_ref, idx_ref):
    half_w = jnp.float32(W / 2.0)

    def cell(v):                                   # nearest 1-D center index
        c = jnp.floor((v + 1.0) * half_w)
        return jnp.clip(c, 0.0, float(W - 1)).astype(jnp.int32)

    ci = cell(x_ref[pl.ds(0, 1), :])               # (1, TM) each
    cj = cell(x_ref[pl.ds(1, 1), :])
    ck = cell(x_ref[pl.ds(2, 1), :])
    idx_ref[...] = ci * (W * W) + cj * W + ck


def get_code_indices(flat_x):
    """flat_x: (M, 3) float32 -> (M,) int32 nearest-codebook indices."""
    M = flat_x.shape[0]
    tm = min(TM_MAX, _round_up(M, 128))
    m_pad = _round_up(M, tm)
    # points on lanes; padded tail is harmless (sliced off below)
    xT = jnp.zeros((3, m_pad), jnp.float32).at[:, :M].set(flat_x.T)

    idx = pl.pallas_call(
        _index_kernel,
        out_shape=jax.ShapeDtypeStruct((1, m_pad), jnp.int32),
        grid_spec=pltpu.PrefetchScalarGridSpec(
            num_scalar_prefetch=0,
            grid=(m_pad // tm,),
            in_specs=[pl.BlockSpec((3, tm), lambda m: (0, m))],
            out_specs=pl.BlockSpec((1, tm), lambda m: (0, m)),
        ),
        compiler_params=pltpu.CompilerParams(
            dimension_semantics=("parallel",)),
    )(xT)
    return idx[0, :M]


# ---------------------------------------------------------------------------
# Kernel 2: voxel occupancy (one sublane-dense block per batch) + scaling
# ---------------------------------------------------------------------------
def _voxel_kernel(n_points, idx_ref, voxel_ref):
    b = pl.program_id(0)
    row = jax.lax.broadcasted_iota(jnp.int32, (VOX_ROWS, VOX_COLS), 0)
    lane = jax.lax.broadcasted_iota(jnp.int32, (VOX_ROWS, VOX_COLS), 1)
    pos = row * VOX_COLS + lane           # global codebook index of each slot

    def body(n, occ):
        v = idx_ref[b * n_points + n]
        return jnp.maximum(occ, (pos == v).astype(jnp.float32))

    unroll = n_points if n_points <= 32 else 8
    occ = jax.lax.fori_loop(0, n_points, body,
                            jnp.zeros((VOX_ROWS, VOX_COLS), jnp.float32),
                            unroll=unroll)
    voxel_ref[0, :, :] = (occ - 0.5) / 0.5 * 0.8


def build_voxel(indices):
    """indices: (B, N) int32 -> (B, 1, 32, 32, 32) float32 scaled occupancy."""
    B, N = indices.shape
    # TODO(synk): for very large B*N move the indices out of SMEM scalar
    # prefetch (1-D SMEM pads to next_pow2(4*B*N)) and compare from VMEM
    # windows instead.
    voxel = pl.pallas_call(
        functools.partial(_voxel_kernel, N),
        out_shape=jax.ShapeDtypeStruct((B, VOX_ROWS, VOX_COLS), jnp.float32),
        grid_spec=pltpu.PrefetchScalarGridSpec(
            num_scalar_prefetch=1,            # flattened indices land in SMEM
            grid=(B,),
            in_specs=[],
            out_specs=pl.BlockSpec((1, VOX_ROWS, VOX_COLS),
                                   lambda b, idx_ref: (b, 0, 0)),
        ),
        compiler_params=pltpu.CompilerParams(
            dimension_semantics=("parallel",)),
    )(indices.reshape(-1).astype(jnp.int32))
    return voxel.reshape(B, 1, W, W, W)


# ---------------------------------------------------------------------------
# Forward wrapper (glue: reshapes, per-batch sort)
# ---------------------------------------------------------------------------
def point_quantizer_forward(x):
    B, N = x.shape[0], x.shape[1]
    flat_x = x.reshape(B * N, 3).astype(jnp.float32)
    idx = get_code_indices(flat_x)                              # (B*N,) int32
    # TODO(synk): per-row sort left in plain JAX (no clean Pallas TPU sort).
    idx = jnp.sort(idx.reshape(B, N), axis=1)
    voxel = build_voxel(idx)
    return idx, voxel


if __name__ == "__main__":
    key = jax.random.PRNGKey(0)
    B, N = 2, 8
    x = jax.random.uniform(key, (B, N, 3), minval=-1.0, maxval=1.0,
                           dtype=jnp.float32)

    idx, voxel = jax.jit(point_quantizer_forward)(x)
    jax.block_until_ready((idx, voxel))

    # --- correctness checks against a pure-JAX brute-force reference ---
    grid_points = make_grid_points(W)                           # (32768, 3)
    flat_x = x.reshape(B * N, 3)
    d_ref = (jnp.sum(flat_x ** 2, 1, keepdims=True)
             + jnp.sum(grid_points ** 2, 1)
             - 2.0 * flat_x @ grid_points.T)                    # (B*N, 32768)
    ref_min = jnp.min(d_ref, axis=1)

    # Validate the *unsorted* per-point indices (the old harness compared
    # sorted/permuted indices against per-point minima, which was wrong).
    raw_idx = jax.jit(get_code_indices)(flat_x)                 # (B*N,)
    chosen = d_ref[jnp.arange(B * N), raw_idx]
    assert bool(jnp.all(chosen <= ref_min + 1e-5)), \
        "kernel indices are not nearest grid points"

    # The forward output must be the per-batch sorted version of those indices.
    assert bool(jnp.array_equal(idx, jnp.sort(raw_idx.reshape(B, N), axis=1)))

    ref_voxel = jnp.zeros((B, K_TOTAL), jnp.float32)
    ref_voxel = ref_voxel.at[jnp.arange(B)[:, None], idx].set(1.0)
    ref_voxel = ((ref_voxel - 0.5) / 0.5 * 0.8).reshape(B, 1, W, W, W)
    assert bool(jnp.allclose(voxel, ref_voxel))

    assert idx.shape == (B, N) and voxel.shape == (B, 1, W, W, W)
    print("KERNEL_OK")
</pallas_src>

<mosaic_0001>
module attributes {stable_mosaic.version = 11 : i64} {
  func.func @_index_kernel(%arg0: i32, %arg1: memref<3x128xf32, #tpu.memory_space<vmem>>, %arg2: memref<1x128xi32, #tpu.memory_space<vmem>>) attributes {dimension_semantics = [#tpu.dimension_semantics<parallel>], iteration_bounds = array<i64: 1>, scalar_prefetch = 0 : i64, scratch_operands = 0 : i64, tpu.core_type = #tpu.core_type<tc>, window_params = [{transform_indices = @transform_0, window_bounds = array<i64: 3, 128>}, {transform_indices = @transform_1, window_bounds = array<i64: 1, 128>}]} {
    %c0 = arith.constant 0 : index
    %c0_0 = arith.constant 0 : index
    %0 = vector.load %arg1[%c0, %c0_0] : memref<3x128xf32, #tpu.memory_space<vmem>>, vector<1x128xf32>
    %cst = arith.constant 1.000000e+00 : f32
    %1 = vector.broadcast %cst : f32 to vector<1x128xf32>
    %2 = arith.addf %0, %1 : vector<1x128xf32>
    %cst_1 = arith.constant 1.600000e+01 : f32
    %3 = vector.broadcast %cst_1 : f32 to vector<1x128xf32>
    %4 = arith.mulf %2, %3 : vector<1x128xf32>
    %5 = math.floor %4 : vector<1x128xf32>
    %cst_2 = arith.constant 0.000000e+00 : f32
    %cst_3 = arith.constant 3.100000e+01 : f32
    %6 = vector.broadcast %cst_2 : f32 to vector<1x128xf32>
    %7 = arith.maximumf %6, %5 : vector<1x128xf32>
    %8 = vector.broadcast %cst_3 : f32 to vector<1x128xf32>
    %9 = arith.minimumf %8, %7 : vector<1x128xf32>
    %10 = arith.fptosi %9 : vector<1x128xf32> to vector<1x128xi32>
    %c1 = arith.constant 1 : index
    %c0_4 = arith.constant 0 : index
    %11 = vector.load %arg1[%c1, %c0_4] : memref<3x128xf32, #tpu.memory_space<vmem>>, vector<1x128xf32>
    %cst_5 = arith.constant 1.000000e+00 : f32
    %12 = vector.broadcast %cst_5 : f32 to vector<1x128xf32>
    %13 = arith.addf %11, %12 : vector<1x128xf32>
    %cst_6 = arith.constant 1.600000e+01 : f32
    %14 = vector.broadcast %cst_6 : f32 to vector<1x128xf32>
    %15 = arith.mulf %13, %14 : vector<1x128xf32>
    %16 = math.floor %15 : vector<1x128xf32>
    %cst_7 = arith.constant 0.000000e+00 : f32
    %cst_8 = arith.constant 3.100000e+01 : f32
    %17 = vector.broadcast %cst_7 : f32 to vector<1x128xf32>
    %18 = arith.maximumf %17, %16 : vector<1x128xf32>
    %19 = vector.broadcast %cst_8 : f32 to vector<1x128xf32>
    %20 = arith.minimumf %19, %18 : vector<1x128xf32>
    %21 = arith.fptosi %20 : vector<1x128xf32> to vector<1x128xi32>
    %c2 = arith.constant 2 : index
    %c0_9 = arith.constant 0 : index
    %22 = vector.load %arg1[%c2, %c0_9] : memref<3x128xf32, #tpu.memory_space<vmem>>, vector<1x128xf32>
    %cst_10 = arith.constant 1.000000e+00 : f32
    %23 = vector.broadcast %cst_10 : f32 to vector<1x128xf32>
    %24 = arith.addf %22, %23 : vector<1x128xf32>
    %cst_11 = arith.constant 1.600000e+01 : f32
    %25 = vector.broadcast %cst_11 : f32 to vector<1x128xf32>
    %26 = arith.mulf %24, %25 : vector<1x128xf32>
    %27 = math.floor %26 : vector<1x128xf32>
    %cst_12 = arith.constant 0.000000e+00 : f32
    %cst_13 = arith.constant 3.100000e+01 : f32
    %28 = vector.broadcast %cst_12 : f32 to vector<1x128xf32>
    %29 = arith.maximumf %28, %27 : vector<1x128xf32>
    %30 = vector.broadcast %cst_13 : f32 to vector<1x128xf32>
    %31 = arith.minimumf %30, %29 : vector<1x128xf32>
    %32 = arith.fptosi %31 : vector<1x128xf32> to vector<1x128xi32>
    %c1024_i32 = arith.constant 1024 : i32
    %33 = vector.broadcast %c1024_i32 : i32 to vector<1x128xi32>
    %34 = arith.muli %10, %33 : vector<1x128xi32>
    %c32_i32 = arith.constant 32 : i32
    %35 = vector.broadcast %c32_i32 : i32 to vector<1x128xi32>
    %36 = arith.muli %21, %35 : vector<1x128xi32>
    %37 = arith.addi %34, %36 : vector<1x128xi32>
    %38 = arith.addi %37, %32 : vector<1x128xi32>
    %c0_14 = arith.constant 0 : index
    %c0_15 = arith.constant 0 : index
    %39 = vector.load %arg2[%c0_14, %c0_15] : memref<1x128xi32, #tpu.memory_space<vmem>>, vector<1x128xi32>
    tpu.vector_store %arg2[%c0_14, %c0_15], %38 {strides = array<i32>} : memref<1x128xi32, #tpu.memory_space<vmem>>, vector<1x128xi32>,
    return
  }
  func.func @transform_0(%arg0: i32) -> (i32, i32) {
    %c0_i32 = arith.constant 0 : i32
    %c0_i32_0 = arith.constant 0 : i32
    return %c0_i32, %arg0 : i32, i32
  }
  func.func @transform_1(%arg0: i32) -> (i32, i32) {
    %c0_i32 = arith.constant 0 : i32
    %c0_i32_0 = arith.constant 0 : i32
    return %c0_i32, %arg0 : i32, i32
  }
}

module attributes {stable_mosaic.version = 11 : i64} {
  func.func @_voxel_kernel(%arg0: i32, %arg1: memref<16xi32, #tpu.memory_space<smem>>, %arg2: memref<1x16x2048xf32, #tpu.memory_space<vmem>>) attributes {dimension_semantics = [#tpu.dimension_semantics<parallel>], iteration_bounds = array<i64: 2>, scalar_prefetch = 1 : i64, scratch_operands = 0 : i64, tpu.core_type = #tpu.core_type<tc>, window_params = [{transform_indices = @transform_0, window_bounds = array<i64: 1, 16, 2048>}]} {
    %0 = tpu.iota {dimensions = array<i32: 0>} : vector<16x2048xi32>
    %1 = tpu.iota {dimensions = array<i32: 1>} : vector<16x2048xi32>
    %c2048_i32 = arith.constant 2048 : i32
    %2 = vector.broadcast %c2048_i32 : i32 to vector<16x2048xi32>
    %3 = arith.muli %0, %2 : vector<16x2048xi32>
    %4 = arith.addi %3, %1 : vector<16x2048xi32>
    %cst = arith.constant 0.000000e+00 : f32
    %5 = vector.broadcast %cst : f32 to vector<16x2048xf32>
    %c0_i32 = arith.constant 0 : i32
    %c8_i32 = arith.constant 8 : i32
    %6 = arith.muli %arg0, %c8_i32 : i32
    %7 = arith.addi %6, %c0_i32 : i32
    %8 = arith.index_cast %7 : i32 to index
    %9 = memref.load %arg1[%8] : memref<16xi32, #tpu.memory_space<smem>>
    %10 = vector.broadcast %9 : i32 to vector<16x2048xi32>
    %11 = arith.cmpi eq, %4, %10 : vector<16x2048xi32>
    %12 = arith.extui %11 : vector<16x2048xi1> to vector<16x2048xi32>
    %13 = arith.sitofp %12 : vector<16x2048xi32> to vector<16x2048xf32>
    %14 = arith.maximumf %5, %13 : vector<16x2048xf32>
    %c1_i32 = arith.constant 1 : i32
    %c8_i32_0 = arith.constant 8 : i32
    %15 = arith.muli %arg0, %c8_i32_0 : i32
    %16 = arith.addi %15, %c1_i32 : i32
    %17 = arith.index_cast %16 : i32 to index
    %18 = memref.load %arg1[%17] : memref<16xi32, #tpu.memory_space<smem>>
    %19 = vector.broadcast %18 : i32 to vector<16x2048xi32>
    %20 = arith.cmpi eq, %4, %19 : vector<16x2048xi32>
    %21 = arith.extui %20 : vector<16x2048xi1> to vector<16x2048xi32>
    %22 = arith.sitofp %21 : vector<16x2048xi32> to vector<16x2048xf32>
    %23 = arith.maximumf %14, %22 : vector<16x2048xf32>
    %c2_i32 = arith.constant 2 : i32
    %c8_i32_1 = arith.constant 8 : i32
    %24 = arith.muli %arg0, %c8_i32_1 : i32
    %25 = arith.addi %24, %c2_i32 : i32
    %26 = arith.index_cast %25 : i32 to index
    %27 = memref.load %arg1[%26] : memref<16xi32, #tpu.memory_space<smem>>
    %28 = vector.broadcast %27 : i32 to vector<16x2048xi32>
    %29 = arith.cmpi eq, %4, %28 : vector<16x2048xi32>
    %30 = arith.extui %29 : vector<16x2048xi1> to vector<16x2048xi32>
    %31 = arith.sitofp %30 : vector<16x2048xi32> to vector<16x2048xf32>
    %32 = arith.maximumf %23, %31 : vector<16x2048xf32>
    %c3_i32 = arith.constant 3 : i32
    %c8_i32_2 = arith.constant 8 : i32
    %33 = arith.muli %arg0, %c8_i32_2 : i32
    %34 = arith.addi %33, %c3_i32 : i32
    %35 = arith.index_cast %34 : i32 to index
    %36 = memref.load %arg1[%35] : memref<16xi32, #tpu.memory_space<smem>>
    %37 = vector.broadcast %36 : i32 to vector<16x2048xi32>
    %38 = arith.cmpi eq, %4, %37 : vector<16x2048xi32>
    %39 = arith.extui %38 : vector<16x2048xi1> to vector<16x2048xi32>
    %40 = arith.sitofp %39 : vector<16x2048xi32> to vector<16x2048xf32>
    %41 = arith.maximumf %32, %40 : vector<16x2048xf32>
    %c4_i32 = arith.constant 4 : i32
    %c8_i32_3 = arith.constant 8 : i32
    %42 = arith.muli %arg0, %c8_i32_3 : i32
    %43 = arith.addi %42, %c4_i32 : i32
    %44 = arith.index_cast %43 : i32 to index
    %45 = memref.load %arg1[%44] : memref<16xi32, #tpu.memory_space<smem>>
    %46 = vector.broadcast %45 : i32 to vector<16x2048xi32>
    %47 = arith.cmpi eq, %4, %46 : vector<16x2048xi32>
    %48 = arith.extui %47 : vector<16x2048xi1> to vector<16x2048xi32>
    %49 = arith.sitofp %48 : vector<16x2048xi32> to vector<16x2048xf32>
    %50 = arith.maximumf %41, %49 : vector<16x2048xf32>
    %c5_i32 = arith.constant 5 : i32
    %c8_i32_4 = arith.constant 8 : i32
    %51 = arith.muli %arg0, %c8_i32_4 : i32
    %52 = arith.addi %51, %c5_i32 : i32
    %53 = arith.index_cast %52 : i32 to index
    %54 = memref.load %arg1[%53] : memref<16xi32, #tpu.memory_space<smem>>
    %55 = vector.broadcast %54 : i32 to vector<16x2048xi32>
    %56 = arith.cmpi eq, %4, %55 : vector<16x2048xi32>
    %57 = arith.extui %56 : vector<16x2048xi1> to vector<16x2048xi32>
    %58 = arith.sitofp %57 : vector<16x2048xi32> to vector<16x2048xf32>
    %59 = arith.maximumf %50, %58 : vector<16x2048xf32>
    %c6_i32 = arith.constant 6 : i32
    %c8_i32_5 = arith.constant 8 : i32
    %60 = arith.muli %arg0, %c8_i32_5 : i32
    %61 = arith.addi %60, %c6_i32 : i32
    %62 = arith.index_cast %61 : i32 to index
    %63 = memref.load %arg1[%62] : memref<16xi32, #tpu.memory_space<smem>>
    %64 = vector.broadcast %63 : i32 to vector<16x2048xi32>
    %65 = arith.cmpi eq, %4, %64 : vector<16x2048xi32>
    %66 = arith.extui %65 : vector<16x2048xi1> to vector<16x2048xi32>
    %67 = arith.sitofp %66 : vector<16x2048xi32> to vector<16x2048xf32>
    %68 = arith.maximumf %59, %67 : vector<16x2048xf32>
    %c7_i32 = arith.constant 7 : i32
    %c8_i32_6 = arith.constant 8 : i32
    %69 = arith.muli %arg0, %c8_i32_6 : i32
    %70 = arith.addi %69, %c7_i32 : i32
    %71 = arith.index_cast %70 : i32 to index
    %72 = memref.load %arg1[%71] : memref<16xi32, #tpu.memory_space<smem>>
    %73 = vector.broadcast %72 : i32 to vector<16x2048xi32>
    %74 = arith.cmpi eq, %4, %73 : vector<16x2048xi32>
    %75 = arith.extui %74 : vector<16x2048xi1> to vector<16x2048xi32>
    %76 = arith.sitofp %75 : vector<16x2048xi32> to vector<16x2048xf32>
    %77 = arith.maximumf %68, %76 : vector<16x2048xf32>
    %c8_i32_7 = arith.constant 8 : i32
    %cst_8 = arith.constant 5.000000e-01 : f32
    %78 = vector.broadcast %cst_8 : f32 to vector<16x2048xf32>
    %79 = arith.subf %77, %78 : vector<16x2048xf32>
    %cst_9 = arith.constant 5.000000e-01 : f32
    %80 = vector.broadcast %cst_9 : f32 to vector<16x2048xf32>
    %81 = arith.divf %79, %80 : vector<16x2048xf32>
    %cst_10 = arith.constant 8.000000e-01 : f32
    %82 = vector.broadcast %cst_10 : f32 to vector<16x2048xf32>
    %83 = arith.mulf %81, %82 : vector<16x2048xf32>
    %c0 = arith.constant 0 : index
    %c0_11 = arith.constant 0 : index
    %c0_12 = arith.constant 0 : index
    %84 = vector.load %arg2[%c0, %c0_11, %c0_12] : memref<1x16x2048xf32, #tpu.memory_space<vmem>>, vector<1x16x2048xf32>
    %85 = vector.shape_cast %84 : vector<1x16x2048xf32> to vector<16x2048xf32>
    %86 = vector.shape_cast %83 : vector<16x2048xf32> to vector<1x16x2048xf32>
    tpu.vector_store %arg2[%c0, %c0_11, %c0_12], %86 {strides = array<i32>} : memref<1x16x2048xf32, #tpu.memory_space<vmem>>, vector<1x16x2048xf32>,
    return
  }
  func.func @transform_0(%arg0: i32, %arg1: memref<16xi32, #tpu.memory_space<smem>>) -> (i32, i32, i32) {
    %c0_i32 = arith.constant 0 : i32
    %c0_i32_0 = arith.constant 0 : i32
    %c0_i32_1 = arith.constant 0 : i32
    return %arg0, %c0_i32, %c0_i32_0 : i32, i32, i32
  }
}

</mosaic_0001>

<llo_original>
// kernel: squeeze.1
$region0: #{squeeze.1}
  %s0 = inlined_call_operand.vmem [shape: s32[16], index: 0, kind: input, shape index: {}]
  %s1 = inlined_call_operand.vmem [shape: s32[2,8], index: 1, kind: output, shape index: {}]
  $region1: #{squeeze.1} parent=0
    #allocation0 [shape = 'u8[4096]{0}', space=vmem, size = 0x1000, scoped, tag = 'scoped mem for output reshape']
    #allocation1 [shape = 'u8[4096]{0}', space=vmem, size = 0x1000, scoped, tag = 'scoped mem for input reshape']
    %s3 = sshllo.u32 0, 1
    %v4 = vld [vmem:[%s0] sm:%s3]
    %5 = vst [vmem:[#allocation1] sm:%s3] %v4
    %v6 = vld [vmem:[#allocation1] sm:$0x1]
    %vm7 = vcmask 64512
    %8 = vst.msk [vmem:[#allocation0] sm:$0x1] %vm7, %v6
    %v9 = vld [vmem:[#allocation1] sm:$0x1]
    %10 = vrot.lane.b32.xlu0 %v9, 120
    %v11 = vpop.permute.xlu0 %10
    %vm12 = vcmask 64512
    %s13 = scalar_lea.vmem [#allocation0], 1
    %14 = vst.msk [vmem:[%s13] sm:$0x1] %vm12, %v11
    %s16 = sshllo.u32 0, 2
    %v18 = vld [vmem:[#allocation0] sm:%s16]
    %s19 = sshllo.u32 0, 2
    %20 = vst [vmem:[%s1] sm:%s19] %v18

// kernel: point_quantizer_forward.2
$region0: #{point_quantizer_forward.2}
  #allocation0 [shape = 'u32[]', space=smem, size = 0x4, offset = 0x4, fixed_abs, tag = 'smem constant byte address 0x4 - core index']
  #allocation1 [shape = 'u32[144,128]{1,0:T(1,128)}', space=vmem, size = 0x12000, scoped, tag = 'internal scratch']
  %s0 = inlined_call_operand.vmem [shape: f32[3,128], index: 0, kind: input, shape index: {}]
  %s1 = inlined_call_operand.vmem [shape: s32[1,128], index: 1, kind: output, shape index: {}]
  %s2 = sld [smem:[#allocation0]]
  $region14: #{point_quantizer_forward.2} parent=0
    _
  %s4 = ssub.s32 1, %s2
  %s5 = scalar_select 0, %s4, %s2
  // Predicated region
  $region2: #{point_quantizer_forward.2} parent=0 // pred_check
    _
  $region3: #{point_quantizer_forward.2} parent=0 // pred_check_branch
    %7 = sbr.rel (0) target = $region5
  $region4: #{point_quantizer_forward.2} parent=0 // pred_region
    _
  $region5: #{point_quantizer_forward.2} parent=0 // pred_fallthru
    _
  %v8 = vld [vmem:[%s0] sm:$0x1]
  %v9 = vadd.f32 %v8, 1.0
  %v10 = vmul.f32 %v9, 16.0
  %v11 = vfloor.f32 %v10
  %v12 = vmax.f32 %v11, 0.0
  %v13 = vmin.f32 %v12, 31.0
  %v14 = vcvt.f32.s32.to.zero.pseudo %v13
  %v15 = vld [vmem:[%s0 + $0x1] sm:$0x1]
  %v16 = vadd.f32 %v15, 1.0
  %v17 = vmul.f32 %v16, 16.0
  %v18 = vfloor.f32 %v17
  %v19 = vmax.f32 %v18, 0.0
  %v20 = vmin.f32 %v19, 31.0
  %v21 = vcvt.f32.s32.to.zero.pseudo %v20
  %v22 = vld [vmem:[%s0 + $0x2] sm:$0x1]
  %v23 = vadd.f32 %v22, 1.0
  %v24 = vmul.f32 %v23, 16.0
  %v25 = vfloor.f32 %v24
  %v26 = vmax.f32 %v25, 0.0
  %v27 = vmin.f32 %v26, 31.0
  %v28 = vcvt.f32.s32.to.zero.pseudo %v27
  %v29 = vmul.u32 %v14, 1024
  %v30 = vmul.u32 %v21, 32
  %v31 = vadd.s32 %v29, %v30
  %v32 = vadd.s32 %v31, %v28
  %33 = vst [vmem:[%s1] sm:$0x1] %v32
  // Predicated region
  $region6: #{point_quantizer_forward.2} parent=0 // pred_check
    _
  $region7: #{point_quantizer_forward.2} parent=0 // pred_check_branch
    %35 = sbr.rel (0) target = $region9
  $region8: #{point_quantizer_forward.2} parent=0 // pred_region
    _
  $region9: #{point_quantizer_forward.2} parent=0 // pred_fallthru
    _
  // Predicated region
  $region10: #{point_quantizer_forward.2} parent=0 // pred_check
    _
  $region11: #{point_quantizer_forward.2} parent=0 // pred_check_branch
    %37 = sbr.rel (0) target = $region13
  $region12: #{point_quantizer_forward.2} parent=0 // pred_region
    _
  $region13: #{point_quantizer_forward.2} parent=0 // pred_fallthru
    _

// kernel: point_quantizer_forward.3
$region0: #{point_quantizer_forward.3}
  #allocation0 [shape = 'u32[]', space=smem, size = 0x4, offset = 0x4, fixed_abs, tag = 'smem constant byte address 0x4 - core index']
  #allocation1 [shape = 'u32[144,128]{1,0:T(1,128)}', space=vmem, size = 0x12000, scoped, tag = 'internal scratch']
  #allocation2 [shape = 's32[1]{0}', space=sflag, size = 0x4, scoped, tag = 'scoped memory for point_quantizer_forward.3']
  #allocation3 [shape = 'u8[512]{0}', space=smem, size = 0x200, scoped, tag = 'prefetched SMEM operand 0']
  %s0 = inlined_call_operand.vmem [shape: s32[16], index: 0, kind: input, shape index: {}]
  %s1 = inlined_call_operand.vmem [shape: f32[2,16,2048], index: 1, kind: output, shape index: {}]
  %s2 = sld [smem:[#allocation0]]
  $region25: #{point_quantizer_forward.3} parent=0
    _
  %s4 = ssub.s32 1, %s2
  %s5 = scalar_select 0, %s4, %s2
  %s6 = sshll.u32 %s0, 4
  %s7 = int_to_ptr.vmem [resolvable:$true] %s6
  %9 = dma.vmem_to_smem %s7, 16, [#allocation3], [#allocation2]
  %10 = dma.done [#allocation2], 16
  %11 = sfence
  loop: start=0, step=1, limit=3
  $region2: #{point_quantizer_forward.3} parent=0 // loop_pre_header
    _
  $region3: #{point_quantizer_forward.3} parent=0 // loop_header
    %s13 = sphi 0, %s17
    %p14 = scmp.ge.s32.totalorder %s13, 3
    %s22 = sphi 0, %s24
    %s25 = sphi 0, %s22
    %s35 = sphi 0, %s25
  $region4: #{point_quantizer_forward.3} parent=0 // loop_header_branch
    %16 = sbr.rel (%p14) target = $region8
  $region5: #{point_quantizer_forward.3} parent=0 // loop_body
    %s18 = ssub.s32 %s13, 1
    %s19 = sadd.s32 %s13, 1
    %s20 = ssub.s32 %s13, %s19
    %p21 = scmp.eq.s32.totalorder %s20, 0
    %s23 = sadd.s32 %s22, 1
    %s24 = scalar_select %p21, %s22, %s23
    %p26 = pneg %p21
    %p27 = scmp.eq.s32.totalorder %s13, 1
    %p28 = por %p26, %p27
    %p29 = scmp.ne.s32.totalorder %s22, %s25
    %p30 = scmp.eq.s32.totalorder %s13, 0
    %p31 = por %p29, %p30
    %p32 = scmp.ne.s32.totalorder %s22, %s25
    %p33 = scmp.eq.s32.totalorder %s18, 1
    %p34 = por %p32, %p33
    %p36 = scmp.ne.s32.totalorder %s25, %s35
    %p37 = scmp.eq.s32.totalorder %s18, 0
    %p38 = por %p36, %p37
    %p39 = scmp.lt.s32.totalorder %s13, 2
    // Predicated region
    $region9: #{point_quantizer_forward.3} parent=5 // pred_check
      %p40 = pneg %p39
    $region10: #{point_quantizer_forward.3} parent=5 // pred_check_branch
      %42 = sbr.rel (%p40) target = $region12
    $region11: #{point_quantizer_forward.3} parent=5 // pred_region
      %p43 = pneg %p31
      %p44 = pneg %p28
      %p45 = scmp.lt.s32.totalorder %s13, 1
      %s46 = scalar_select %p45, %s13, 1
      %s47 = smul.addr %s46, 32
      %s48 = smul.addr %s47, 8
      %s49 = scalar_lea.vmem %s1, %s48
      %p50 = scmp.lt.s32.totalorder %s13, 1
      %s51 = scalar_select %p50, %s13, 1
      %s52 = smul.addr %s51, 32
      %s53 = smul.addr %s52, 8
      %s54 = scalar_lea.vmem %s1, %s53
      %v55 = vlaneseq
      %v56 = vshrl.u32 %v55, 7
      %v57 = vadd.s32 %v56, 8
      %v58 = vlaneseq
      %v59 = vand.u32 %v58, 127
      %v60 = vadd.s32 %v59, 128
      %v61 = vadd.s32 %v59, 256
      %v62 = vadd.s32 %v59, 384
      %v63 = vadd.s32 %v59, 512
      %v64 = vadd.s32 %v59, 640
      %v65 = vadd.s32 %v59, 768
      %v66 = vadd.s32 %v59, 896
      %v67 = vadd.s32 %v59, 1024
      %v68 = vadd.s32 %v59, 1152
      %v69 = vadd.s32 %v59, 1280
      %v70 = vadd.s32 %v59, 1408
      %v71 = vadd.s32 %v59, 1536
      %v72 = vadd.s32 %v59, 1664
      %v73 = vadd.s32 %v59, 1792
      %v74 = vadd.s32 %v59, 1920
      %v75 = vmul.u32 %v56, 2048
      %v76 = vmul.u32 %v57, 2048
      %v77 = vadd.s32 %v75, %v59
      %v78 = vadd.s32 %v75, %v60
      %v79 = vadd.s32 %v75, %v61
      %v80 = vadd.s32 %v75, %v62
      %v81 = vadd.s32 %v75, %v63
      %v82 = vadd.s32 %v75, %v64
      %v83 = vadd.s32 %v75, %v65
      %v84 = vadd.s32 %v75, %v66
      %v85 = vadd.s32 %v75, %v67
      %v86 = vadd.s32 %v75, %v68
      %v87 = vadd.s32 %v75, %v69
      %v88 = vadd.s32 %v75, %v70
      %v89 = vadd.s32 %v75, %v71
      %v90 = vadd.s32 %v75, %v72
      %v91 = vadd.s32 %v75, %v73
      %v92 = vadd.s32 %v75, %v74
      %v93 = vadd.s32 %v76, %v59
      %v94 = vadd.s32 %v76, %v60
      %v95 = vadd.s32 %v76, %v61
      %v96 = vadd.s32 %v76, %v62
      %v97 = vadd.s32 %v76, %v63
      %v98 = vadd.s32 %v76, %v64
      %v99 = vadd.s32 %v76, %v65
      %v100 = vadd.s32 %v76, %v66
      %v101 = vadd.s32 %v76, %v67
      %v102 = vadd.s32 %v76, %v68
      %v103 = vadd.s32 %v76, %v69
      %v104 = vadd.s32 %v76, %v70
      %v105 = vadd.s32 %v76, %v71
      %v106 = vadd.s32 %v76, %v72
      %v107 = vadd.s32 %v76, %v73
      %v108 = vadd.s32 %v76, %v74
      %s109 = smul.u32 %s13, 8
      %s110 = sld [smem:[#allocation3 + %s109]]
      %v111 = vstv %s110
      %vm112 = vcmp.eq.s32.totalorder %v77, %v111
      %vm113 = vcmp.eq.s32.totalorder %v78, %v111
      %vm114 = vcmp.eq.s32.totalorder %v79, %v111
      %vm115 = vcmp.eq.s32.totalorder %v80, %v111
      %vm116 = vcmp.eq.s32.totalorder %v81, %v111
      %vm117 = vcmp.eq.s32.totalorder %v82, %v111
      %vm118 = vcmp.eq.s32.totalorder %v83, %v111
      %vm119 = vcmp.eq.s32.totalorder %v84, %v111
      %vm120 = vcmp.eq.s32.totalorder %v85, %v111
      %vm121 = vcmp.eq.s32.totalorder %v86, %v111
      %vm122 = vcmp.eq.s32.totalorder %v87, %v111
      %vm123 = vcmp.eq.s32.totalorder %v88, %v111
      %vm124 = vcmp.eq.s32.totalorder %v89, %v111
      %vm125 = vcmp.eq.s32.totalorder %v90, %v111
      %vm126 = vcmp.eq.s32.totalorder %v91, %v111
      %vm127 = vcmp.eq.s32.totalorder %v92, %v111
      %vm128 = vcmp.eq.s32.totalorder %v93, %v111
      %vm129 = vcmp.eq.s32.totalorder %v94, %v111
      %vm130 = vcmp.eq.s32.totalorder %v95, %v111
      %vm131 = vcmp.eq.s32.totalorder %v96, %v111
      %vm132 = vcmp.eq.s32.totalorder %v97, %v111
      %vm133 = vcmp.eq.s32.totalorder %v98, %v111
      %vm134 = vcmp.eq.s32.totalorder %v99, %v111
      %vm135 = vcmp.eq.s32.totalorder %v100, %v111
      %vm136 = vcmp.eq.s32.totalorder %v101, %v111
      %vm137 = vcmp.eq.s32.totalorder %v102, %v111
      %vm138 = vcmp.eq.s32.totalorder %v103, %v111
      %vm139 = vcmp.eq.s32.totalorder %v104, %v111
      %vm140 = vcmp.eq.s32.totalorder %v105, %v111
      %vm141 = vcmp.eq.s32.totalorder %v106, %v111
      %vm142 = vcmp.eq.s32.totalorder %v107, %v111
      %vm143 = vcmp.eq.s32.totalorder %v108, %v111
      %v144 = vsel %vm112, 1, 0
      %v145 = vsel %vm113, 1, 0
      %v146 = vsel %vm114, 1, 0
      %v147 = vsel %vm115, 1, 0
      %v148 = vsel %vm116, 1, 0
      %v149 = vsel %vm117, 1, 0
      %v150 = vsel %vm118, 1, 0
      %v151 = vsel %vm119, 1, 0
      %v152 = vsel %vm120, 1, 0
      %v153 = vsel %vm121, 1, 0
      %v154 = vsel %vm122, 1, 0
      %v155 = vsel %vm123, 1, 0
      %v156 = vsel %vm124, 1, 0
      %v157 = vsel %vm125, 1, 0
      %v158 = vsel %vm126, 1, 0
      %v159 = vsel %vm127, 1, 0
      %v160 = vsel %vm128, 1, 0
      %v161 = vsel %vm129, 1, 0
      %v162 = vsel %vm130, 1, 0
      %v163 = vsel %vm131, 1, 0
      %v164 = vsel %vm132, 1, 0
      %v165 = vsel %vm133, 1, 0
      %v166 = vsel %vm134, 1, 0
      %v167 = vsel %vm135, 1, 0
      %v168 = vsel %vm136, 1, 0
      %v169 = vsel %vm137, 1, 0
      %v170 = vsel %vm138, 1, 0
      %v171 = vsel %vm139, 1, 0
      %v172 = vsel %vm140, 1, 0
      %v173 = vsel %vm141, 1, 0
      %v174 = vsel %vm142, 1, 0
      %v175 = vsel %vm143, 1, 0
      %v176 = vcvt.s32.f32 %v144
      %v177 = vcvt.s32.f32 %v145
      %v178 = vcvt.s32.f32 %v146
      %v179 = vcvt.s32.f32 %v147
      %v180 = vcvt.s32.f32 %v148
      %v181 = vcvt.s32.f32 %v149
      %v182 = vcvt.s32.f32 %v150
      %v183 = vcvt.s32.f32 %v151
      %v184 = vcvt.s32.f32 %v152
      %v185 = vcvt.s32.f32 %v153
      %v186 = vcvt.s32.f32 %v154
      %v187 = vcvt.s32.f32 %v155
      %v188 = vcvt.s32.f32 %v156
      %v189 = vcvt.s32.f32 %v157
      %v190 = vcvt.s32.f32 %v158
      %v191 = vcvt.s32.f32 %v159
      %v192 = vcvt.s32.f32 %v160
      %v193 = vcvt.s32.f32 %v161
      %v194 = vcvt.s32.f32 %v162
      %v195 = vcvt.s32.f32 %v163
      %v196 = vcvt.s32.f32 %v164
      %v197 = vcvt.s32.f32 %v165
      %v198 = vcvt.s32.f32 %v166
      %v199 = vcvt.s32.f32 %v167
      %v200 = vcvt.s32.f32 %v168
      %v201 = vcvt.s32.f32 %v169
      %v202 = vcvt.s32.f32 %v170
      %v203 = vcvt.s32.f32 %v171
      %v204 = vcvt.s32.f32 %v172
      %v205 = vcvt.s32.f32 %v173
      %v206 = vcvt.s32.f32 %v174
      %v207 = vcvt.s32.f32 %v175
      %v208 = vmax.f32 %v176, 0.0
      %v209 = vmax.f32 %v177, 0.0
      %v210 = vmax.f32 %v178, 0.0
      %v211 = vmax.f32 %v179, 0.0
      %v212 = vmax.f32 %v180, 0.0
      %v213 = vmax.f32 %v181, 0.0
      %v214 = vmax.f32 %v182, 0.0
      %v215 = vmax.f32 %v183, 0.0
      %v216 = vmax.f32 %v184, 0.0
      %v217 = vmax.f32 %v185, 0.0
      %v218 = vmax.f32 %v186, 0.0
      %v219 = vmax.f32 %v187, 0.0
      %v220 = vmax.f32 %v188, 0.0
      %v221 = vmax.f32 %v189, 0.0
      %v222 = vmax.f32 %v190, 0.0
      %v223 = vmax.f32 %v191, 0.0
      %v224 = vmax.f32 %v192, 0.0
      %v225 = vmax.f32 %v193, 0.0
      %v226 = vmax.f32 %v194, 0.0
      %v227 = vmax.f32 %v195, 0.0
      %v228 = vmax.f32 %v196, 0.0
      %v229 = vmax.f32 %v197, 0.0
      %v230 = vmax.f32 %v198, 0.0
      %v231 = vmax.f32 %v199, 0.0
      %v232 = vmax.f32 %v200, 0.0
      %v233 = vmax.f32 %v201, 0.0
      %v234 = vmax.f32 %v202, 0.0
      %v235 = vmax.f32 %v203, 0.0
      %v236 = vmax.f32 %v204, 0.0
      %v237 = vmax.f32 %v205, 0.0
      %v238 = vmax.f32 %v206, 0.0
      %v239 = vmax.f32 %v207, 0.0
      %s240 = sadd.s32 %s109, 1
      %s241 = sld [smem:[#allocation3 + %s240]]
      %v242 = vstv %s241
      %vm243 = vcmp.eq.s32.totalorder %v77, %v242
      %vm244 = vcmp.eq.s32.totalorder %v78, %v242
      %vm245 = vcmp.eq.s32.totalorder %v79, %v242
      %vm246 = vcmp.eq.s32.totalorder %v80, %v242
      %vm247 = vcmp.eq.s32.totalorder %v81, %v242
      %vm248 = vcmp.eq.s32.totalorder %v82, %v242
      %vm249 = vcmp.eq.s32.totalorder %v83, %v242
      %vm250 = vcmp.eq.s32.totalorder %v84, %v242
      %vm251 = vcmp.eq.s32.totalorder %v85, %v242
      %vm252 = vcmp.eq.s32.totalorder %v86, %v242
      %vm253 = vcmp.eq.s32.totalorder %v87, %v242
      %vm254 = vcmp.eq.s32.totalorder %v88, %v242
      %vm255 = vcmp.eq.s32.totalorder %v89, %v242
      %vm256 = vcmp.eq.s32.totalorder %v90, %v242
      %vm257 = vcmp.eq.s32.totalorder %v91, %v242
      %vm258 = vcmp.eq.s32.totalorder %v92, %v242
      %vm259 = vcmp.eq.s32.totalorder %v93, %v242
      %vm260 = vcmp.eq.s32.totalorder %v94, %v242
      %vm261 = vcmp.eq.s32.totalorder %v95, %v242
      %vm262 = vcmp.eq.s32.totalorder %v96, %v242
      %vm263 = vcmp.eq.s32.totalorder %v97, %v242
      %vm264 = vcmp.eq.s32.totalorder %v98, %v242
      %vm265 = vcmp.eq.s32.totalorder %v99, %v242
      %vm266 = vcmp.eq.s32.totalorder %v100, %v242
      %vm267 = vcmp.eq.s32.totalorder %v101, %v242
      %vm268 = vcmp.eq.s32.totalorder %v102, %v242
      %vm269 = vcmp.eq.s32.totalorder %v103, %v242
      %vm270 = vcmp.eq.s32.totalorder %v104, %v242
      %vm271 = vcmp.eq.s32.totalorder %v105, %v242
      %vm272 = vcmp.eq.s32.totalorder %v106, %v242
      %vm273 = vcmp.eq.s32.totalorder %v107, %v242
      %vm274 = vcmp.eq.s32.totalorder %v108, %v242
      %v275 = vsel %vm243, 1, 0
      %v276 = vsel %vm244, 1, 0
      %v277 = vsel %vm245, 1, 0
      %v278 = vsel %vm246, 1, 0
      %v279 = vsel %vm247, 1, 0
      %v280 = vsel %vm248, 1, 0
      %v281 = vsel %vm249, 1, 0
      %v282 = vsel %vm250, 1, 0
      %v283 = vsel %vm251, 1, 0
      %v284 = vsel %vm252, 1, 0
      %v285 = vsel %vm253, 1, 0
      %v286 = vsel %vm254, 1, 0
      %v287 = vsel %vm255, 1, 0
      %v288 = vsel %vm256, 1, 0
      %v289 = vsel %vm257, 1, 0
      %v290 = vsel %vm258, 1, 0
      %v291 = vsel %vm259, 1, 0
      %v292 = vsel %vm260, 1, 0
      %v293 = vsel %vm261, 1, 0
      %v294 = vsel %vm262, 1, 0
      %v295 = vsel %vm263, 1, 0
      %v296 = vsel %vm264, 1, 0
      %v297 = vsel %vm265, 1, 0
      %v298 = vsel %vm266, 1, 0
      %v299 = vsel %vm267, 1, 0
      %v300 = vsel %vm268, 1, 0
      %v301 = vsel %vm269, 1, 0
      %v302 = vsel %vm270, 1, 0
      %v303 = vsel %vm271, 1, 0
      %v304 = vsel %vm272, 1, 0
      %v305 = vsel %vm273, 1, 0
      %v306 = vsel %vm274, 1, 0
      %v307 = vcvt.s32.f32 %v275
      %v308 = vcvt.s32.f32 %v276
      %v309 = vcvt.s32.f32 %v277
      %v310 = vcvt.s32.f32 %v278
      %v311 = vcvt.s32.f32 %v279
      %v312 = vcvt.s32.f32 %v280
      %v313 = vcvt.s32.f32 %v281
      %v314 = vcvt.s32.f32 %v282
      %v315 = vcvt.s32.f32 %v283
      %v316 = vcvt.s32.f32 %v284
      %v317 = vcvt.s32.f32 %v285
      %v318 = vcvt.s32.f32 %v286
      %v319 = vcvt.s32.f32 %v287
      %v320 = vcvt.s32.f32 %v288
      %v321 = vcvt.s32.f32 %v289
      %v322 = vcvt.s32.f32 %v290
      %v323 = vcvt.s32.f32 %v291
      %v324 = vcvt.s32.f32 %v292
      %v325 = vcvt.s32.f32 %v293
      %v326 = vcvt.s32.f32 %v294
      %v327 = vcvt.s32.f32 %v295
      %v328 = vcvt.s32.f32 %v296
      %v329 = vcvt.s32.f32 %v297
      %v330 = vcvt.s32.f32 %v298
      %v331 = vcvt.s32.f32 %v299
      %v332 = vcvt.s32.f32 %v300
      %v333 = vcvt.s32.f32 %v301
      %v334 = vcvt.s32.f32 %v302
      %v335 = vcvt.s32.f32 %v303
      %v336 = vcvt.s32.f32 %v304
      %v337 = vcvt.s32.f32 %v305
      %v338 = vcvt.s32.f32 %v306
      %v339 = vmax.f32 %v208, %v307
      %v340 = vmax.f32 %v209, %v308
      %v341 = vmax.f32 %v210, %v309
      %v342 = vmax.f32 %v211, %v310
      %v343 = vmax.f32 %v212, %v311
      %v344 = vmax.f32 %v213, %v312
      %v345 = vmax.f32 %v214, %v313
      %v346 = vmax.f32 %v215, %v314
      %v347 = vmax.f32 %v216, %v315
      %v348 = vmax.f32 %v217, %v316
      %v349 = vmax.f32 %v218, %v317
      %v350 = vmax.f32 %v219, %v318
      %v351 = vmax.f32 %v220, %v319
      %v352 = vmax.f32 %v221, %v320
      %v353 = vmax.f32 %v222, %v321
      %v354 = vmax.f32 %v223, %v322
      %v355 = vmax.f32 %v224, %v323
      %v356 = vmax.f32 %v225, %v324
      %v357 = vmax.f32 %v226, %v325
      %v358 = vmax.f32 %v227, %v326
      %v359 = vmax.f32 %v228, %v327
      %v360 = vmax.f32 %v229, %v328
      %v361 = vmax.f32 %v230, %v329
      %v362 = vmax.f32 %v231, %v330
      %v363 = vmax.f32 %v232, %v331
      %v364 = vmax.f32 %v233, %v332
      %v365 = vmax.f32 %v234, %v333
      %v366 = vmax.f32 %v235, %v334
      %v367 = vmax.f32 %v236, %v335
      %v368 = vmax.f32 %v237, %v336
      %v369 = vmax.f32 %v238, %v337
      %v370 = vmax.f32 %v239, %v338
      %s371 = sadd.s32 %s109, 2
      %s372 = sld [smem:[#allocation3 + %s371]]
      %v373 = vstv %s372
      %vm374 = vcmp.eq.s32.totalorder %v77, %v373
      %vm375 = vcmp.eq.s32.totalorder %v78, %v373
      %vm376 = vcmp.eq.s32.totalorder %v79, %v373
      %vm377 = vcmp.eq.s32.totalorder %v80, %v373
      %vm378 = vcmp.eq.s32.totalorder %v81, %v373
      %vm379 = vcmp.eq.s32.totalorder %v82, %v373
      %vm380 = vcmp.eq.s32.totalorder %v83, %v373
      %vm381 = vcmp.eq.s32.totalorder %v84, %v373
      %vm382 = vcmp.eq.s32.totalorder %v85, %v373
      %vm383 = vcmp.eq.s32.totalorder %v86, %v373
      %vm384 = vcmp.eq.s32.totalorder %v87, %v373
      %vm385 = vcmp.eq.s32.totalorder %v88, %v373
      %vm386 = vcmp.eq.s32.totalorder %v89, %v373
      %vm387 = vcmp.eq.s32.totalorder %v90, %v373
      %vm388 = vcmp.eq.s32.totalorder %v91, %v373
      %vm389 = vcmp.eq.s32.totalorder %v92, %v373
      %vm390 = vcmp.eq.s32.totalorder %v93, %v373
      %vm391 = vcmp.eq.s32.totalorder %v94, %v373
      %vm392 = vcmp.eq.s32.totalorder %v95, %v373
      %vm393 = vcmp.eq.s32.totalorder %v96, %v373
      %vm394 = vcmp.eq.s32.totalorder %v97, %v373
      %vm395 = vcmp.eq.s32.totalorder %v98, %v373
      %vm396 = vcmp.eq.s32.totalorder %v99, %v373
      %vm397 = vcmp.eq.s32.totalorder %v100, %v373
      %vm398 = vcmp.eq.s32.totalorder %v101, %v373
      %vm399 = vcmp.eq.s32.totalorder %v102, %v373
      %vm400 = vcmp.eq.s32.totalorder %v103, %v373
      %vm401 = vcmp.eq.s32.totalorder %v104, %v373
      %vm402 = vcmp.eq.s32.totalorder %v105, %v373
      %vm403 = vcmp.eq.s32.totalorder %v106, %v373
      %vm404 = vcmp.eq.s32.totalorder %v107, %v373
      %vm405 = vcmp.eq.s32.totalorder %v108, %v373
      %v406 = vsel %vm374, 1, 0
      %v407 = vsel %vm375, 1, 0
      %v408 = vsel %vm376, 1, 0
      %v409 = vsel %vm377, 1, 0
      %v410 = vsel %vm378, 1, 0
      %v411 = vsel %vm379, 1, 0
      %v412 = vsel %vm380, 1, 0
      %v413 = vsel %vm381, 1, 0
      %v414 = vsel %vm382, 1, 0
      %v415 = vsel %vm383, 1, 0
      %v416 = vsel %vm384, 1, 0
      %v417 = vsel %vm385, 1, 0
      %v418 = vsel %vm386, 1, 0
      %v419 = vsel %vm387, 1, 0
      %v420 = vsel %vm388, 1, 0
      %v421 = vsel %vm389, 1, 0
      %v422 = vsel %vm390, 1, 0
      %v423 = vsel %vm391, 1, 0
      %v424 = vsel %vm392, 1, 0
      %v425 = vsel %vm393, 1, 0
      %v426 = vsel %vm394, 1, 0
      %v427 = vsel %vm395, 1, 0
      %v428 = vsel %vm396, 1, 0
      %v429 = vsel %vm397, 1, 0
      %v430 = vsel %vm398, 1, 0
      %v431 = vsel %vm399, 1, 0
      %v432 = vsel %vm400, 1, 0
      %v433 = vsel %vm401, 1, 0
      %v434 = vsel %vm402, 1, 0
      %v435 = vsel %vm403, 1, 0
      %v436 = vsel %vm404, 1, 0
      %v437 = vsel %vm405, 1, 0
      %v438 = vcvt.s32.f32 %v406
      %v439 = vcvt.s32.f32 %v407
      %v440 = vcvt.s32.f32 %v408
      %v441 = vcvt.s32.f32 %v409
      %v442 = vcvt.s32.f32 %v410
      %v443 = vcvt.s32.f32 %v411
      %v444 = vcvt.s32.f32 %v412
      %v445 = vcvt.s32.f32 %v413
      %v446 = vcvt.s32.f32 %v414
      %v447 = vcvt.s32.f32 %v415
      %v448 = vcvt.s32.f32 %v416
      %v449 = vcvt.s32.f32 %v417
      %v450 = vcvt.s32.f32 %v418
      %v451 = vcvt.s32.f32 %v419
      %v452 = vcvt.s32.f32 %v420
      %v453 = vcvt.s32.f32 %v421
      %v454 = vcvt.s32.f32 %v422
      %v455 = vcvt.s32.f32 %v423
      %v456 = vcvt.s32.f32 %v424
      %v457 = vcvt.s32.f32 %v425
      %v458 = vcvt.s32.f32 %v426
      %v459 = vcvt.s32.f32 %v427
      %v460 = vcvt.s32.f32 %v428
      %v461 = vcvt.s32.f32 %v429
      %v462 = vcvt.s32.f32 %v430
      %v463 = vcvt.s32.f32 %v431
      %v464 = vcvt.s32.f32 %v432
      %v465 = vcvt.s32.f32 %v433
      %v466 = vcvt.s32.f32 %v434
      %v467 = vcvt.s32.f32 %v435
      %v468 = vcvt.s32.f32 %v436
      %v469 = vcvt.s32.f32 %v437
      %v470 = vmax.f32 %v339, %v438
      %v471 = vmax.f32 %v340, %v439
      %v472 = vmax.f32 %v341, %v440
      %v473 = vmax.f32 %v342, %v441
      %v474 = vmax.f32 %v343, %v442
      %v475 = vmax.f32 %v344, %v443
      %v476 = vmax.f32 %v345, %v444
      %v477 = vmax.f32 %v346, %v445
      %v478 = vmax.f32 %v347, %v446
      %v479 = vmax.f32 %v348, %v447
      %v480 = vmax.f32 %v349, %v448
      %v481 = vmax.f32 %v350, %v449
      %v482 = vmax.f32 %v351, %v450
      %v483 = vmax.f32 %v352, %v451
      %v484 = vmax.f32 %v353, %v452
      %v485 = vmax.f32 %v354, %v453
      %v486 = vmax.f32 %v355, %v454
      %v487 = vmax.f32 %v356, %v455
      %v488 = vmax.f32 %v357, %v456
      %v489 = vmax.f32 %v358, %v457
      %v490 = vmax.f32 %v359, %v458
      %v491 = vmax.f32 %v360, %v459
      %v492 = vmax.f32 %v361, %v460
      %v493 = vmax.f32 %v362, %v461
      %v494 = vmax.f32 %v363, %v462
      %v495 = vmax.f32 %v364, %v463
      %v496 = vmax.f32 %v365, %v464
      %v497 = vmax.f32 %v366, %v465
      %v498 = vmax.f32 %v367, %v466
      %v499 = vmax.f32 %v368, %v467
      %v500 = vmax.f32 %v369, %v468
      %v501 = vmax.f32 %v370, %v469
      %s502 = sadd.s32 %s109, 3
      %s503 = sld [smem:[#allocation3 + %s502]]
      %v504 = vstv %s503
      %vm505 = vcmp.eq.s32.totalorder %v77, %v504
      %vm506 = vcmp.eq.s32.totalorder %v78, %v504
      %vm507 = vcmp.eq.s32.totalorder %v79, %v504
      %vm508 = vcmp.eq.s32.totalorder %v80, %v504
      %vm509 = vcmp.eq.s32.totalorder %v81, %v504
      %vm510 = vcmp.eq.s32.totalorder %v82, %v504
      %vm511 = vcmp.eq.s32.totalorder %v83, %v504
      %vm512 = vcmp.eq.s32.totalorder %v84, %v504
      %vm513 = vcmp.eq.s32.totalorder %v85, %v504
      %vm514 = vcmp.eq.s32.totalorder %v86, %v504
      %vm515 = vcmp.eq.s32.totalorder %v87, %v504
      %vm516 = vcmp.eq.s32.totalorder %v88, %v504
      %vm517 = vcmp.eq.s32.totalorder %v89, %v504
      %vm518 = vcmp.eq.s32.totalorder %v90, %v504
      %vm519 = vcmp.eq.s32.totalorder %v91, %v504
      %vm520 = vcmp.eq.s32.totalorder %v92, %v504
      %vm521 = vcmp.eq.s32.totalorder %v93, %v504
      %vm522 = vcmp.eq.s32.totalorder %v94, %v504
      %vm523 = vcmp.eq.s32.totalorder %v95, %v504
      %vm524 = vcmp.eq.s32.totalorder %v96, %v504
      %vm525 = vcmp.eq.s32.totalorder %v97, %v504
      %vm526 = vcmp.eq.s32.totalorder %v98, %v504
      %vm527 = vcmp.eq.s32.totalorder %v99, %v504
      %vm528 = vcmp.eq.s32.totalorder %v100, %v504
      %vm529 = vcmp.eq.s32.totalorder %v101, %v504
      %vm530 = vcmp.eq.s32.totalorder %v102, %v504
      %vm531 = vcmp.eq.s32.totalorder %v103, %v504
      %vm532 = vcmp.eq.s32.totalorder %v104, %v504
      %vm533 = vcmp.eq.s32.totalorder %v105, %v504
      %vm534 = vcmp.eq.s32.totalorder %v106, %v504
      %vm535 = vcmp.eq.s32.totalorder %v107, %v504
      %vm536 = vcmp.eq.s32.totalorder %v108, %v504
      %v537 = vsel %vm505, 1, 0
      %v538 = vsel %vm506, 1, 0
      %v539 = vsel %vm507, 1, 0
      %v540 = vsel %vm508, 1, 0
      %v541 = vsel %vm509, 1, 0
      %v542 = vsel %vm510, 1, 0
      %v543 = vsel %vm511, 1, 0
      %v544 = vsel %vm512, 1, 0
      %v545 = vsel %vm513, 1, 0
      %v546 = vsel %vm514, 1, 0
      %v547 = vsel %vm515, 1, 0
      %v548 = vsel %vm516, 1, 0
      %v549 = vsel %vm517, 1, 0
      %v550 = vsel %vm518, 1, 0
      %v551 = vsel %vm519, 1, 0
      %v552 = vsel %vm520, 1, 0
      %v553 = vsel %vm521, 1, 0
      %v554 = vsel %vm522, 1, 0
      %v555 = vsel %vm523, 1, 0
      %v556 = vsel %vm524, 1, 0
      %v557 = vsel %vm525, 1, 0
      %v558 = vsel %vm526, 1, 0
      %v559 = vsel %vm527, 1, 0
      %v560 = vsel %vm528, 1, 0
      %v561 = vsel %vm529, 1, 0
      %v562 = vsel %vm530, 1, 0
      %v563 = vsel %vm531, 1, 0
      %v564 = vsel %vm532, 1, 0
      %v565 = vsel %vm533, 1, 0
      %v566 = vsel %vm534, 1, 0
      %v567 = vsel %vm535, 1, 0
      %v568 = vsel %vm536, 1, 0
      %v569 = vcvt.s32.f32 %v537
      %v570 = vcvt.s32.f32 %v538
      %v571 = vcvt.s32.f32 %v539
      %v572 = vcvt.s32.f32 %v540
      %v573 = vcvt.s32.f32 %v541
      %v574 = vcvt.s32.f32 %v542
      %v575 = vcvt.s32.f32 %v543
      %v576 = vcvt.s32.f32 %v544
      %v577 = vcvt.s32.f32 %v545
      %v578 = vcvt.s32.f32 %v546
      %v579 = vcvt.s32.f32 %v547
      %v580 = vcvt.s32.f32 %v548
      %v581 = vcvt.s32.f32 %v549
      %v582 = vcvt.s32.f32 %v550
      %v583 = vcvt.s32.f32 %v551
      %v584 = vcvt.s32.f32 %v552
      %v585 = vcvt.s32.f32 %v553
      %v586 = vcvt.s32.f32 %v554
      %v587 = vcvt.s32.f32 %v555
      %v588 = vcvt.s32.f32 %v556
      %v589 = vcvt.s32.f32 %v557
      %v590 = vcvt.s32.f32 %v558
      %v591 = vcvt.s32.f32 %v559
      %v592 = vcvt.s32.f32 %v560
      %v593 = vcvt.s32.f32 %v561
      %v594 = vcvt.s32.f32 %v562
      %v595 = vcvt.s32.f32 %v563
      %v596 = vcvt.s32.f32 %v564
      %v597 = vcvt.s32.f32 %v565
      %v598 = vcvt.s32.f32 %v566
      %v599 = vcvt.s32.f32 %v567
      %v600 = vcvt.s32.f32 %v568
      %v601 = vmax.f32 %v470, %v569
      %v602 = vmax.f32 %v471, %v570
      %v603 = vmax.f32 %v472, %v571
      %v604 = vmax.f32 %v473, %v572
      %v605 = vmax.f32 %v474, %v573
      %v606 = vmax.f32 %v475, %v574
      %v607 = vmax.f32 %v476, %v575
      %v608 = vmax.f32 %v477, %v576
      %v609 = vmax.f32 %v478, %v577
      %v610 = vmax.f32 %v479, %v578
      %v611 = vmax.f32 %v480, %v579
      %v612 = vmax.f32 %v481, %v580
      %v613 = vmax.f32 %v482, %v581
      %v614 = vmax.f32 %v483, %v582
      %v615 = vmax.f32 %v484, %v583
      %v616 = vmax.f32 %v485, %v584
      %v617 = vmax.f32 %v486, %v585
      %v618 = vmax.f32 %v487, %v586
      %v619 = vmax.f32 %v488, %v587
      %v620 = vmax.f32 %v489, %v588
      %v621 = vmax.f32 %v490, %v589
      %v622 = vmax.f32 %v491, %v590
      %v623 = vmax.f32 %v492, %v591
      %v624 = vmax.f32 %v493, %v592
      %v625 = vmax.f32 %v494, %v593
      %v626 = vmax.f32 %v495, %v594
      %v627 = vmax.f32 %v496, %v595
      %v628 = vmax.f32 %v497, %v596
      %v629 = vmax.f32 %v498, %v597
      %v630 = vmax.f32 %v499, %v598
      %v631 = vmax.f32 %v500, %v599
      %v632 = vmax.f32 %v501, %v600
      %s633 = sadd.s32 %s109, 4
      %s634 = sld [smem:[#allocation3 + %s633]]
      %v635 = vstv %s634
      %vm636 = vcmp.eq.s32.totalorder %v77, %v635
      %vm637 = vcmp.eq.s32.totalorder %v78, %v635
      %vm638 = vcmp.eq.s32.totalorder %v79, %v635
      %vm639 = vcmp.eq.s32.totalorder %v80, %v635
      %vm640 = vcmp.eq.s32.totalorder %v81, %v635
      %vm641 = vcmp.eq.s32.totalorder %v82, %v635
      %vm642 = vcmp.eq.s32.totalorder %v83, %v635
      %vm643 = vcmp.eq.s32.totalorder %v84, %v635
      %vm644 = vcmp.eq.s32.totalorder %v85, %v635
      %vm645 = vcmp.eq.s32.totalorder %v86, %v635
      %vm646 = vcmp.eq.s32.totalorder %v87, %v635
      %vm647 = vcmp.eq.s32.totalorder %v88, %v635
      %vm648 = vcmp.eq.s32.totalorder %v89, %v635
      %vm649 = vcmp.eq.s32.totalorder %v90, %v635
      %vm650 = vcmp.eq.s32.totalorder %v91, %v635
      %vm651 = vcmp.eq.s32.totalorder %v92, %v635
      %vm652 = vcmp.eq.s32.totalorder %v93, %v635
      %vm653 = vcmp.eq.s32.totalorder %v94, %v635
      %vm654 = vcmp.eq.s32.totalorder %v95, %v635
      %vm655 = vcmp.eq.s32.totalorder %v96, %v635
      %vm656 = vcmp.eq.s32.totalorder %v97, %v635
      %vm657 = vcmp.eq.s32.totalorder %v98, %v635
      %vm658 = vcmp.eq.s32.totalorder %v99, %v635
      %vm659 = vcmp.eq.s32.totalorder %v100, %v635
      %vm660 = vcmp.eq.s32.totalorder %v101, %v635
      %vm661 = vcmp.eq.s32.totalorder %v102, %v635
      %vm662 = vcmp.eq.s32.totalorder %v103, %v635
      %vm663 = vcmp.eq.s32.totalorder %v104, %v635
      %vm664 = vcmp.eq.s32.totalorder %v105, %v635
      %vm665 = vcmp.eq.s32.totalorder %v106, %v635
      %vm666 = vcmp.eq.s32.totalorder %v107, %v635
      %vm667 = vcmp.eq.s32.totalorder %v108, %v635
      %v668 = vsel %vm636, 1, 0
      %v669 = vsel %vm637, 1, 0
      %v670 = vsel %vm638, 1, 0
      %v671 = vsel %vm639, 1, 0
      %v672 = vsel %vm640, 1, 0
      %v673 = vsel %vm641, 1, 0
      %v674 = vsel %vm642, 1, 0
      %v675 = vsel %vm643, 1, 0
      %v676 = vsel %vm644, 1, 0
      %v677 = vsel %vm645, 1, 0
      %v678 = vsel %vm646, 1, 0
      %v679 = vsel %vm647, 1, 0
      %v680 = vsel %vm648, 1, 0
      %v681 = vsel %vm649, 1, 0
      %v682 = vsel %vm650, 1, 0
      %v683 = vsel %vm651, 1, 0
      %v684 = vsel %vm652, 1, 0
      %v685 = vsel %vm653, 1, 0
      %v686 = vsel %vm654, 1, 0
      %v687 = vsel %vm655, 1, 0
      %v688 = vsel %vm656, 1, 0
      %v689 = vsel %vm657, 1, 0
      %v690 = vsel %vm658, 1, 0
      %v691 = vsel %vm659, 1, 0
      %v692 = vsel %vm660, 1, 0
      %v693 = vsel %vm661, 1, 0
      %v694 = vsel %vm662, 1, 0
      %v695 = vsel %vm663, 1, 0
      %v696 = vsel %vm664, 1, 0
      %v697 = vsel %vm665, 1, 0
      %v698 = vsel %vm666, 1, 0
      %v699 = vsel %vm667, 1, 0
      %v700 = vcvt.s32.f32 %v668
      %v701 = vcvt.s32.f32 %v669
      %v702 = vcvt.s32.f32 %v670
      %v703 = vcvt.s32.f32 %v671
      %v704 = vcvt.s32.f32 %v672
      %v705 = vcvt.s32.f32 %v673
      %v706 = vcvt.s32.f32 %v674
      %v707 = vcvt.s32.f32 %v675
      %v708 = vcvt.s32.f32 %v676
      %v709 = vcvt.s32.f32 %v677
      %v710 = vcvt.s32.f32 %v678
      %v711 = vcvt.s32.f32 %v679
      %v712 = vcvt.s32.f32 %v680
      %v713 = vcvt.s32.f32 %v681
      %v714 = vcvt.s32.f32 %v682
      %v715 = vcvt.s32.f32 %v683
      %v716 = vcvt.s32.f32 %v684
      %v717 = vcvt.s32.f32 %v685
      %v718 = vcvt.s32.f32 %v686
      %v719 = vcvt.s32.f32 %v687
      %v720 = vcvt.s32.f32 %v688
      %v721 = vcvt.s32.f32 %v689
      %v722 = vcvt.s32.f32 %v690
      %v723 = vcvt.s32.f32 %v691
      %v724 = vcvt.s32.f32 %v692
      %v725 = vcvt.s32.f32 %v693
      %v726 = vcvt.s32.f32 %v694
      %v727 = vcvt.s32.f32 %v695
      %v728 = vcvt.s32.f32 %v696
      %v729 = vcvt.s32.f32 %v697
      %v730 = vcvt.s32.f32 %v698
      %v731 = vcvt.s32.f32 %v699
      %v732 = vmax.f32 %v601, %v700
      %v733 = vmax.f32 %v602, %v701
      %v734 = vmax.f32 %v603, %v702
      %v735 = vmax.f32 %v604, %v703
      %v736 = vmax.f32 %v605, %v704
      %v737 = vmax.f32 %v606, %v705
      %v738 = vmax.f32 %v607, %v706
      %v739 = vmax.f32 %v608, %v707
      %v740 = vmax.f32 %v609, %v708
      %v741 = vmax.f32 %v610, %v709
      %v742 = vmax.f32 %v611, %v710
      %v743 = vmax.f32 %v612, %v711
      %v744 = vmax.f32 %v613, %v712
      %v745 = vmax.f32 %v614, %v713
      %v746 = vmax.f32 %v615, %v714
      %v747 = vmax.f32 %v616, %v715
      %v748 = vmax.f32 %v617, %v716
      %v749 = vmax.f32 %v618, %v717
      %v750 = vmax.f32 %v619, %v718
      %v751 = vmax.f32 %v620, %v719
      %v752 = vmax.f32 %v621, %v720
      %v753 = vmax.f32 %v622, %v721
      %v754 = vmax.f32 %v623, %v722
      %v755 = vmax.f32 %v624, %v723
      %v756 = vmax.f32 %v625, %v724
      %v757 = vmax.f32 %v626, %v725
      %v758 = vmax.f32 %v627, %v726
      %v759 = vmax.f32 %v628, %v727
      %v760 = vmax.f32 %v629, %v728
      %v761 = vmax.f32 %v630, %v729
      %v762 = vmax.f32 %v631, %v730
      %v763 = vmax.f32 %v632, %v731
      %s764 = sadd.s32 %s109, 5
      %s765 = sld [smem:[#allocation3 + %s764]]
      %v766 = vstv %s765
      %vm767 = vcmp.eq.s32.totalorder %v77, %v766
      %vm768 = vcmp.eq.s32.totalorder %v78, %v766
      %vm769 = vcmp.eq.s32.totalorder %v79, %v766
      %vm770 = vcmp.eq.s32.totalorder %v80, %v766
      %vm771 = vcmp.eq.s32.totalorder %v81, %v766
      %vm772 = vcmp.eq.s32.totalorder %v82, %v766
      %vm773 = vcmp.eq.s32.totalorder %v83, %v766
      %vm774 = vcmp.eq.s32.totalorder %v84, %v766
      %vm775 = vcmp.eq.s32.totalorder %v85, %v766
      %vm776 = vcmp.eq.s32.totalorder %v86, %v766
      %vm777 = vcmp.eq.s32.totalorder %v87, %v766
      %vm778 = vcmp.eq.s32.totalorder %v88, %v766
      %vm779 = vcmp.eq.s32.totalorder %v89, %v766
      %vm780 = vcmp.eq.s32.totalorder %v90, %v766
      %vm781 = vcmp.eq.s32.totalorder %v91, %v766
      %vm782 = vcmp.eq.s32.totalorder %v92, %v766
      %vm783 = vcmp.eq.s32.totalorder %v93, %v766
      %vm784 = vcmp.eq.s32.totalorder %v94, %v766
      %vm785 = vcmp.eq.s32.totalorder %v95, %v766
      %vm786 = vcmp.eq.s32.totalorder %v96, %v766
      %vm787 = vcmp.eq.s32.totalorder %v97, %v766
      %vm788 = vcmp.eq.s32.totalorder %v98, %v766
      %vm789 = vcmp.eq.s32.totalorder %v99, %v766
      %vm790 = vcmp.eq.s32.totalorder %v100, %v766
      %vm791 = vcmp.eq.s32.totalorder %v101, %v766
      %vm792 = vcmp.eq.s32.totalorder %v102, %v766
      %vm793 = vcmp.eq.s32.totalorder %v103, %v766
      %vm794 = vcmp.eq.s32.totalorder %v104, %v766
      %vm795 = vcmp.eq.s32.totalorder %v105, %v766
      %vm796 = vcmp.eq.s32.totalorder %v106, %v766
      %vm797 = vcmp.eq.s32.totalorder %v107, %v766
      %vm798 = vcmp.eq.s32.totalorder %v108, %v766
      %v799 = vsel %vm767, 1, 0
      %v800 = vsel %vm768, 1, 0
      %v801 = vsel %vm769, 1, 0
      %v802 = vsel %vm770, 1, 0
      %v803 = vsel %vm771, 1, 0
      %v804 = vsel %vm772, 1, 0
      %v805 = vsel %vm773, 1, 0
      %v806 = vsel %vm774, 1, 0
      %v807 = vsel %vm775, 1, 0
      %v808 = vsel %vm776, 1, 0
      %v809 = vsel %vm777, 1, 0
      %v810 = vsel %vm778, 1, 0
      %v811 = vsel %vm779, 1, 0
      %v812 = vsel %vm780, 1, 0
      %v813 = vsel %vm781, 1, 0
      %v814 = vsel %vm782, 1, 0
      %v815 = vsel %vm783, 1, 0
      %v816 = vsel %vm784, 1, 0
      %v817 = vsel %vm785, 1, 0
      %v818 = vsel %vm786, 1, 0
      %v819 = vsel %vm787, 1, 0
      %v820 = vsel %vm788, 1, 0
      %v821 = vsel %vm789, 1, 0
      %v822 = vsel %vm790, 1, 0
      %v823 = vsel %vm791, 1, 0
      %v824 = vsel %vm792, 1, 0
      %v825 = vsel %vm793, 1, 0
      %v826 = vsel %vm794, 1, 0
      %v827 = vsel %vm795, 1, 0
      %v828 = vsel %vm796, 1, 0
      %v829 = vsel %vm797, 1, 0
      %v830 = vsel %vm798, 1, 0
      %v831 = vcvt.s32.f32 %v799
      %v832 = vcvt.s32.f32 %v800
      %v833 = vcvt.s32.f32 %v801
      %v834 = vcvt.s32.f32 %v802
      %v835 = vcvt.s32.f32 %v803
      %v836 = vcvt.s32.f32 %v804
      %v837 = vcvt.s32.f32 %v805
      %v838 = vcvt.s32.f32 %v806
      %v839 = vcvt.s32.f32 %v807
      %v840 = vcvt.s32.f32 %v808
      %v841 = vcvt.s32.f32 %v809
      %v842 = vcvt.s32.f32 %v810
      %v843 = vcvt.s32.f32 %v811
      %v844 = vcvt.s32.f32 %v812
      %v845 = vcvt.s32.f32 %v813
      %v846 = vcvt.s32.f32 %v814
      %v847 = vcvt.s32.f32 %v815
      %v848 = vcvt.s32.f32 %v816
      %v849 = vcvt.s32.f32 %v817
      %v850 = vcvt.s32.f32 %v818
      %v851 = vcvt.s32.f32 %v819
      %v852 = vcvt.s32.f32 %v820
      %v853 = vcvt.s32.f32 %v821
      %v854 = vcvt.s32.f32 %v822
      %v855 = vcvt.s32.f32 %v823
      %v856 = vcvt.s32.f32 %v824
      %v857 = vcvt.s32.f32 %v825
      %v858 = vcvt.s32.f32 %v826
      %v859 = vcvt.s32.f32 %v827
      %v860 = vcvt.s32.f32 %v828
      %v861 = vcvt.s32.f32 %v829
      %v862 = vcvt.s32.f32 %v830
      %v863 = vmax.f32 %v732, %v831
      %v864 = vmax.f32 %v733, %v832
      %v865 = vmax.f32 %v734, %v833
      %v866 = vmax.f32 %v735, %v834
      %v867 = vmax.f32 %v736, %v835
      %v868 = vmax.f32 %v737, %v836
      %v869 = vmax.f32 %v738, %v837
      %v870 = vmax.f32 %v739, %v838
      %v871 = vmax.f32 %v740, %v839
      %v872 = vmax.f32 %v741, %v840
      %v873 = vmax.f32 %v742, %v841
      %v874 = vmax.f32 %v743, %v842
      %v875 = vmax.f32 %v744, %v843
      %v876 = vmax.f32 %v745, %v844
      %v877 = vmax.f32 %v746, %v845
      %v878 = vmax.f32 %v747, %v846
      %v879 = vmax.f32 %v748, %v847
      %v880 = vmax.f32 %v749, %v848
      %v881 = vmax.f32 %v750, %v849
      %v882 = vmax.f32 %v751, %v850
      %v883 = vmax.f32 %v752, %v851
      %v884 = vmax.f32 %v753, %v852
      %v885 = vmax.f32 %v754, %v853
      %v886 = vmax.f32 %v755, %v854
      %v887 = vmax.f32 %v756, %v855
      %v888 = vmax.f32 %v757, %v856
      %v889 = vmax.f32 %v758, %v857
      %v890 = vmax.f32 %v759, %v858
      %v891 = vmax.f32 %v760, %v859
      %v892 = vmax.f32 %v761, %v860
      %v893 = vmax.f32 %v762, %v861
      %v894 = vmax.f32 %v763, %v862
      %s895 = sadd.s32 %s109, 6
      %s896 = sld [smem:[#allocation3 + %s895]]
      %v897 = vstv %s896
      %vm898 = vcmp.eq.s32.totalorder %v77, %v897
      %vm899 = vcmp.eq.s32.totalorder %v78, %v897
      %vm900 = vcmp.eq.s32.totalorder %v79, %v897
      %vm901 = vcmp.eq.s32.totalorder %v80, %v897
      %vm902 = vcmp.eq.s32.totalorder %v81, %v897
      %vm903 = vcmp.eq.s32.totalorder %v82, %v897
      %vm904 = vcmp.eq.s32.totalorder %v83, %v897
      %vm905 = vcmp.eq.s32.totalorder %v84, %v897
      %vm906 = vcmp.eq.s32.totalorder %v85, %v897
      %vm907 = vcmp.eq.s32.totalorder %v86, %v897
      %vm908 = vcmp.eq.s32.totalorder %v87, %v897
      %vm909 = vcmp.eq.s32.totalorder %v88, %v897
      %vm910 = vcmp.eq.s32.totalorder %v89, %v897
      %vm911 = vcmp.eq.s32.totalorder %v90, %v897
      %vm912 = vcmp.eq.s32.totalorder %v91, %v897
      %vm913 = vcmp.eq.s32.totalorder %v92, %v897
      %vm914 = vcmp.eq.s32.totalorder %v93, %v897
      %vm915 = vcmp.eq.s32.totalorder %v94, %v897
      %vm916 = vcmp.eq.s32.totalorder %v95, %v897
      %vm917 = vcmp.eq.s32.totalorder %v96, %v897
      %vm918 = vcmp.eq.s32.totalorder %v97, %v897
      %vm919 = vcmp.eq.s32.totalorder %v98, %v897
      %vm920 = vcmp.eq.s32.totalorder %v99, %v897
      %vm921 = vcmp.eq.s32.totalorder %v100, %v897
      %vm922 = vcmp.eq.s32.totalorder %v101, %v897
      %vm923 = vcmp.eq.s32.totalorder %v102, %v897
      %vm924 = vcmp.eq.s32.totalorder %v103, %v897
      %vm925 = vcmp.eq.s32.totalorder %v104, %v897
      %vm926 = vcmp.eq.s32.totalorder %v105, %v897
      %vm927 = vcmp.eq.s32.totalorder %v106, %v897
      %vm928 = vcmp.eq.s32.totalorder %v107, %v897
      %vm929 = vcmp.eq.s32.totalorder %v108, %v897
      %v930 = vsel %vm898, 1, 0
      %v931 = vsel %vm899, 1, 0
      %v932 = vsel %vm900, 1, 0
      %v933 = vsel %vm901, 1, 0
      %v934 = vsel %vm902, 1, 0
      %v935 = vsel %vm903, 1, 0
      %v936 = vsel %vm904, 1, 0
      %v937 = vsel %vm905, 1, 0
      %v938 = vsel %vm906, 1, 0
      %v939 = vsel %vm907, 1, 0
      %v940 = vsel %vm908, 1, 0
      %v941 = vsel %vm909, 1, 0
      %v942 = vsel %vm910, 1, 0
      %v943 = vsel %vm911, 1, 0
      %v944 = vsel %vm912, 1, 0
      %v945 = vsel %vm913, 1, 0
      %v946 = vsel %vm914, 1, 0
      %v947 = vsel %vm915, 1, 0
      %v948 = vsel %vm916, 1, 0
      %v949 = vsel %vm917, 1, 0
      %v950 = vsel %vm918, 1, 0
      %v951 = vsel %vm919, 1, 0
      %v952 = vsel %vm920, 1, 0
      %v953 = vsel %vm921, 1, 0
      %v954 = vsel %vm922, 1, 0
      %v955 = vsel %vm923, 1, 0
      %v956 = vsel %vm924, 1, 0
      %v957 = vsel %vm925, 1, 0
      %v958 = vsel %vm926, 1, 0
      %v959 = vsel %vm927, 1, 0
      %v960 = vsel %vm928, 1, 0
      %v961 = vsel %vm929, 1, 0
      %v962 = vcvt.s32.f32 %v930
      %v963 = vcvt.s32.f32 %v931
      %v964 = vcvt.s32.f32 %v932
      %v965 = vcvt.s32.f32 %v933
      %v966 = vcvt.s32.f32 %v934
      %v967 = vcvt.s32.f32 %v935
      %v968 = vcvt.s32.f32 %v936
      %v969 = vcvt.s32.f32 %v937
      %v970 = vcvt.s32.f32 %v938
      %v971 = vcvt.s32.f32 %v939
      %v972 = vcvt.s32.f32 %v940
      %v973 = vcvt.s32.f32 %v941
      %v974 = vcvt.s32.f32 %v942
      %v975 = vcvt.s32.f32 %v943
      %v976 = vcvt.s32.f32 %v944
      %v977 = vcvt.s32.f32 %v945
      %v978 = vcvt.s32.f32 %v946
      %v979 = vcvt.s32.f32 %v947
      %v980 = vcvt.s32.f32 %v948
      %v981 = vcvt.s32.f32 %v949
      %v982 = vcvt.s32.f32 %v950
      %v983 = vcvt.s32.f32 %v951
      %v984 = vcvt.s32.f32 %v952
      %v985 = vcvt.s32.f32 %v953
      %v986 = vcvt.s32.f32 %v954
      %v987 = vcvt.s32.f32 %v955
      %v988 = vcvt.s32.f32 %v956
      %v989 = vcvt.s32.f32 %v957
      %v990 = vcvt.s32.f32 %v958
      %v991 = vcvt.s32.f32 %v959
      %v992 = vcvt.s32.f32 %v960
      %v993 = vcvt.s32.f32 %v961
      %v994 = vmax.f32 %v863, %v962
      %v995 = vmax.f32 %v864, %v963
      %v996 = vmax.f32 %v865, %v964
      %v997 = vmax.f32 %v866, %v965
      %v998 = vmax.f32 %v867, %v966
      %v999 = vmax.f32 %v868, %v967
      %v1000 = vmax.f32 %v869, %v968
      %v1001 = vmax.f32 %v870, %v969
      %v1002 = vmax.f32 %v871, %v970
      %v1003 = vmax.f32 %v872, %v971
      %v1004 = vmax.f32 %v873, %v972
      %v1005 = vmax.f32 %v874, %v973
      %v1006 = vmax.f32 %v875, %v974
      %v1007 = vmax.f32 %v876, %v975
      %v1008 = vmax.f32 %v877, %v976
      %v1009 = vmax.f32 %v878, %v977
      %v1010 = vmax.f32 %v879, %v978
      %v1011 = vmax.f32 %v880, %v979
      %v1012 = vmax.f32 %v881, %v980
      %v1013 = vmax.f32 %v882, %v981
      %v1014 = vmax.f32 %v883, %v982
      %v1015 = vmax.f32 %v884, %v983
      %v1016 = vmax.f32 %v885, %v984
      %v1017 = vmax.f32 %v886, %v985
      %v1018 = vmax.f32 %v887, %v986
      %v1019 = vmax.f32 %v888, %v987
      %v1020 = vmax.f32 %v889, %v988
      %v1021 = vmax.f32 %v890, %v989
      %v1022 = vmax.f32 %v891, %v990
      %v1023 = vmax.f32 %v892, %v991
      %v1024 = vmax.f32 %v893, %v992
      %v1025 = vmax.f32 %v894, %v993
      %s1026 = sadd.s32 %s109, 7
      %s1027 = sld [smem:[#allocation3 + %s1026]]
      %v1028 = vstv %s1027
      %vm1029 = vcmp.eq.s32.totalorder %v77, %v1028
      %vm1030 = vcmp.eq.s32.totalorder %v78, %v1028
      %vm1031 = vcmp.eq.s32.totalorder %v79, %v1028
      %vm1032 = vcmp.eq.s32.totalorder %v80, %v1028
      %vm1033 = vcmp.eq.s32.totalorder %v81, %v1028
      %vm1034 = vcmp.eq.s32.totalorder %v82, %v1028
      %vm1035 = vcmp.eq.s32.totalorder %v83, %v1028
      %vm1036 = vcmp.eq.s32.totalorder %v84, %v1028
      %vm1037 = vcmp.eq.s32.totalorder %v85, %v1028
      %vm1038 = vcmp.eq.s32.totalorder %v86, %v1028
      %vm1039 = vcmp.eq.s32.totalorder %v87, %v1028
      %vm1040 = vcmp.eq.s32.totalorder %v88, %v1028
      %vm1041 = vcmp.eq.s32.totalorder %v89, %v1028
      %vm1042 = vcmp.eq.s32.totalorder %v90, %v1028
      %vm1043 = vcmp.eq.s32.totalorder %v91, %v1028
      %vm1044 = vcmp.eq.s32.totalorder %v92, %v1028
      %vm1045 = vcmp.eq.s32.totalorder %v93, %v1028
      %vm1046 = vcmp.eq.s32.totalorder %v94, %v1028
      %vm1047 = vcmp.eq.s32.totalorder %v95, %v1028
      %vm1048 = vcmp.eq.s32.totalorder %v96, %v1028
      %vm1049 = vcmp.eq.s32.totalorder %v97, %v1028
      %vm1050 = vcmp.eq.s32.totalorder %v98, %v1028
      %vm1051 = vcmp.eq.s32.totalorder %v99, %v1028
      %vm1052 = vcmp.eq.s32.totalorder %v100, %v1028
      %vm1053 = vcmp.eq.s32.totalorder %v101, %v1028
      %vm1054 = vcmp.eq.s32.totalorder %v102, %v1028
      %vm1055 = vcmp.eq.s32.totalorder %v103, %v1028
      %vm1056 = vcmp.eq.s32.totalorder %v104, %v1028
      %vm1057 = vcmp.eq.s32.totalorder %v105, %v1028
      %vm1058 = vcmp.eq.s32.totalorder %v106, %v1028
      %vm1059 = vcmp.eq.s32.totalorder %v107, %v1028
      %vm1060 = vcmp.eq.s32.totalorder %v108, %v1028
      %v1061 = vsel %vm1029, 1, 0
      %v1062 = vsel %vm1030, 1, 0
      %v1063 = vsel %vm1031, 1, 0
      %v1064 = vsel %vm1032, 1, 0
      %v1065 = vsel %vm1033, 1, 0
      %v1066 = vsel %vm1034, 1, 0
      %v1067 = vsel %vm1035, 1, 0
      %v1068 = vsel %vm1036, 1, 0
      %v1069 = vsel %vm1037, 1, 0
      %v1070 = vsel %vm1038, 1, 0
      %v1071 = vsel %vm1039, 1, 0
      %v1072 = vsel %vm1040, 1, 0
      %v1073 = vsel %vm1041, 1, 0
      %v1074 = vsel %vm1042, 1, 0
      %v1075 = vsel %vm1043, 1, 0
      %v1076 = vsel %vm1044, 1, 0
      %v1077 = vsel %vm1045, 1, 0
      %v1078 = vsel %vm1046, 1, 0
      %v1079 = vsel %vm1047, 1, 0
      %v1080 = vsel %vm1048, 1, 0
      %v1081 = vsel %vm1049, 1, 0
      %v1082 = vsel %vm1050, 1, 0
      %v1083 = vsel %vm1051, 1, 0
      %v1084 = vsel %vm1052, 1, 0
      %v1085 = vsel %vm1053, 1, 0
      %v1086 = vsel %vm1054, 1, 0
      %v1087 = vsel %vm1055, 1, 0
      %v1088 = vsel %vm1056, 1, 0
      %v1089 = vsel %vm1057, 1, 0
      %v1090 = vsel %vm1058, 1, 0
      %v1091 = vsel %vm1059, 1, 0
      %v1092 = vsel %vm1060, 1, 0
      %v1093 = vcvt.s32.f32 %v1061
      %v1094 = vcvt.s32.f32 %v1062
      %v1095 = vcvt.s32.f32 %v1063
      %v1096 = vcvt.s32.f32 %v1064
      %v1097 = vcvt.s32.f32 %v1065
      %v1098 = vcvt.s32.f32 %v1066
      %v1099 = vcvt.s32.f32 %v1067
      %v1100 = vcvt.s32.f32 %v1068
      %v1101 = vcvt.s32.f32 %v1069
      %v1102 = vcvt.s32.f32 %v1070
      %v1103 = vcvt.s32.f32 %v1071
      %v1104 = vcvt.s32.f32 %v1072
      %v1105 = vcvt.s32.f32 %v1073
      %v1106 = vcvt.s32.f32 %v1074
      %v1107 = vcvt.s32.f32 %v1075
      %v1108 = vcvt.s32.f32 %v1076
      %v1109 = vcvt.s32.f32 %v1077
      %v1110 = vcvt.s32.f32 %v1078
      %v1111 = vcvt.s32.f32 %v1079
      %v1112 = vcvt.s32.f32 %v1080
      %v1113 = vcvt.s32.f32 %v1081
      %v1114 = vcvt.s32.f32 %v1082
      %v1115 = vcvt.s32.f32 %v1083
      %v1116 = vcvt.s32.f32 %v1084
      %v1117 = vcvt.s32.f32 %v1085
      %v1118 = vcvt.s32.f32 %v1086
      %v1119 = vcvt.s32.f32 %v1087
      %v1120 = vcvt.s32.f32 %v1088
      %v1121 = vcvt.s32.f32 %v1089
      %v1122 = vcvt.s32.f32 %v1090
      %v1123 = vcvt.s32.f32 %v1091
      %v1124 = vcvt.s32.f32 %v1092
      %v1125 = vmax.f32 %v994, %v1093
      %v1126 = vmax.f32 %v995, %v1094
      %v1127 = vmax.f32 %v996, %v1095
      %v1128 = vmax.f32 %v997, %v1096
      %v1129 = vmax.f32 %v998, %v1097
      %v1130 = vmax.f32 %v999, %v1098
      %v1131 = vmax.f32 %v1000, %v1099
      %v1132 = vmax.f32 %v1001, %v1100
      %v1133 = vmax.f32 %v1002, %v1101
      %v1134 = vmax.f32 %v1003, %v1102
      %v1135 = vmax.f32 %v1004, %v1103
      %v1136 = vmax.f32 %v1005, %v1104
      %v1137 = vmax.f32 %v1006, %v1105
      %v1138 = vmax.f32 %v1007, %v1106
      %v1139 = vmax.f32 %v1008, %v1107
      %v1140 = vmax.f32 %v1009, %v1108
      %v1141 = vmax.f32 %v1010, %v1109
      %v1142 = vmax.f32 %v1011, %v1110
      %v1143 = vmax.f32 %v1012, %v1111
      %v1144 = vmax.f32 %v1013, %v1112
      %v1145 = vmax.f32 %v1014, %v1113
      %v1146 = vmax.f32 %v1015, %v1114
      %v1147 = vmax.f32 %v1016, %v1115
      %v1148 = vmax.f32 %v1017, %v1116
      %v1149 = vmax.f32 %v1018, %v1117
      %v1150 = vmax.f32 %v1019, %v1118
      %v1151 = vmax.f32 %v1020, %v1119
      %v1152 = vmax.f32 %v1021, %v1120
      %v1153 = vmax.f32 %v1022, %v1121
      %v1154 = vmax.f32 %v1023, %v1122
      %v1155 = vmax.f32 %v1024, %v1123
      %v1156 = vmax.f32 %v1025, %v1124
      %v1157 = vsub.f32 %v1125, 0.5
      %v1158 = vsub.f32 %v1126, 0.5
      %v1159 = vsub.f32 %v1127, 0.5
      %v1160 = vsub.f32 %v1128, 0.5
      %v1161 = vsub.f32 %v1129, 0.5
      %v1162 = vsub.f32 %v1130, 0.5
      %v1163 = vsub.f32 %v1131, 0.5
      %v1164 = vsub.f32 %v1132, 0.5
      %v1165 = vsub.f32 %v1133, 0.5
      %v1166 = vsub.f32 %v1134, 0.5
      %v1167 = vsub.f32 %v1135, 0.5
      %v1168 = vsub.f32 %v1136, 0.5
      %v1169 = vsub.f32 %v1137, 0.5
      %v1170 = vsub.f32 %v1138, 0.5
      %v1171 = vsub.f32 %v1139, 0.5
      %v1172 = vsub.f32 %v1140, 0.5
      %v1173 = vsub.f32 %v1141, 0.5
      %v1174 = vsub.f32 %v1142, 0.5
      %v1175 = vsub.f32 %v1143, 0.5
      %v1176 = vsub.f32 %v1144, 0.5
      %v1177 = vsub.f32 %v1145, 0.5
      %v1178 = vsub.f32 %v1146, 0.5
      %v1179 = vsub.f32 %v1147, 0.5
      %v1180 = vsub.f32 %v1148, 0.5
      %v1181 = vsub.f32 %v1149, 0.5
      %v1182 = vsub.f32 %v1150, 0.5
      %v1183 = vsub.f32 %v1151, 0.5
      %v1184 = vsub.f32 %v1152, 0.5
      %v1185 = vsub.f32 %v1153, 0.5
      %v1186 = vsub.f32 %v1154, 0.5
      %v1187 = vsub.f32 %v1155, 0.5
      %v1188 = vsub.f32 %v1156, 0.5
      %v1189 = vrcp.pop 0.5
      %v1190 = vmul.f32 %v1157, %v1189
      %v1191 = vmul.f32 %v1158, %v1189
      %v1192 = vmul.f32 %v1159, %v1189
      %v1193 = vmul.f32 %v1160, %v1189
      %v1194 = vmul.f32 %v1161, %v1189
      %v1195 = vmul.f32 %v1162, %v1189
      %v1196 = vmul.f32 %v1163, %v1189
      %v1197 = vmul.f32 %v1164, %v1189
      %v1198 = vmul.f32 %v1165, %v1189
      %v1199 = vmul.f32 %v1166, %v1189
      %v1200 = vmul.f32 %v1167, %v1189
      %v1201 = vmul.f32 %v1168, %v1189
      %v1202 = vmul.f32 %v1169, %v1189
      %v1203 = vmul.f32 %v1170, %v1189
      %v1204 = vmul.f32 %v1171, %v1189
      %v1205 = vmul.f32 %v1172, %v1189
      %v1206 = vmul.f32 %v1173, %v1189
      %v1207 = vmul.f32 %v1174, %v1189
      %v1208 = vmul.f32 %v1175, %v1189
      %v1209 = vmul.f32 %v1176, %v1189
      %v1210 = vmul.f32 %v1177, %v1189
      %v1211 = vmul.f32 %v1178, %v1189
      %v1212 = vmul.f32 %v1179, %v1189
      %v1213 = vmul.f32 %v1180, %v1189
      %v1214 = vmul.f32 %v1181, %v1189
      %v1215 = vmul.f32 %v1182, %v1189
      %v1216 = vmul.f32 %v1183, %v1189
      %v1217 = vmul.f32 %v1184, %v1189
      %v1218 = vmul.f32 %v1185, %v1189
      %v1219 = vmul.f32 %v1186, %v1189
      %v1220 = vmul.f32 %v1187, %v1189
      %v1221 = vmul.f32 %v1188, %v1189
      %v1222 = vmul.f32 %v1190, 0.8
      %v1223 = vmul.f32 %v1191, 0.8
      %v1224 = vmul.f32 %v1192, 0.8
      %v1225 = vmul.f32 %v1193, 0.8
      %v1226 = vmul.f32 %v1194, 0.8
      %v1227 = vmul.f32 %v1195, 0.8
      %v1228 = vmul.f32 %v1196, 0.8
      %v1229 = vmul.f32 %v1197, 0.8
      %v1230 = vmul.f32 %v1198, 0.8
      %v1231 = vmul.f32 %v1199, 0.8
      %v1232 = vmul.f32 %v1200, 0.8
      %v1233 = vmul.f32 %v1201, 0.8
      %v1234 = vmul.f32 %v1202, 0.8
      %v1235 = vmul.f32 %v1203, 0.8
      %v1236 = vmul.f32 %v1204, 0.8
      %v1237 = vmul.f32 %v1205, 0.8
      %v1238 = vmul.f32 %v1206, 0.8
      %v1239 = vmul.f32 %v1207, 0.8
      %v1240 = vmul.f32 %v1208, 0.8
      %v1241 = vmul.f32 %v1209, 0.8
      %v1242 = vmul.f32 %v1210, 0.8
      %v1243 = vmul.f32 %v1211, 0.8
      %v1244 = vmul.f32 %v1212, 0.8
      %v1245 = vmul.f32 %v1213, 0.8
      %v1246 = vmul.f32 %v1214, 0.8
      %v1247 = vmul.f32 %v1215, 0.8
      %v1248 = vmul.f32 %v1216, 0.8
      %v1249 = vmul.f32 %v1217, 0.8
      %v1250 = vmul.f32 %v1218, 0.8
      %v1251 = vmul.f32 %v1219, 0.8
      %v1252 = vmul.f32 %v1220, 0.8
      %v1253 = vmul.f32 %v1221, 0.8
      %1254 = vst [vmem:[%s54] sm:$0xff] %v1222
      %1255 = vst [vmem:[%s54 + $0x8] sm:$0xff] %v1223
      %1256 = vst [vmem:[%s54 + $0x10] sm:$0xff] %v1224
      %1257 = vst [vmem:[%s54 + $0x18] sm:$0xff] %v1225
      %1258 = vst [vmem:[%s54 + $0x20] sm:$0xff] %v1226
      %1259 = vst [vmem:[%s54 + $0x28] sm:$0xff] %v1227
      %1260 = vst [vmem:[%s54 + $0x30] sm:$0xff] %v1228
      %1261 = vst [vmem:[%s54 + $0x38] sm:$0xff] %v1229
      %1262 = vst [vmem:[%s54 + $0x40] sm:$0xff] %v1230
      %1263 = vst [vmem:[%s54 + $0x48] sm:$0xff] %v1231
      %1264 = vst [vmem:[%s54 + $0x50] sm:$0xff] %v1232
      %1265 = vst [vmem:[%s54 + $0x58] sm:$0xff] %v1233
      %1266 = vst [vmem:[%s54 + $0x60] sm:$0xff] %v1234
      %1267 = vst [vmem:[%s54 + $0x68] sm:$0xff] %v1235
      %1268 = vst [vmem:[%s54 + $0x70] sm:$0xff] %v1236
      %1269 = vst [vmem:[%s54 + $0x78] sm:$0xff] %v1237
      %1270 = vst [vmem:[%s54 + $0x80] sm:$0xff] %v1238
      %1271 = vst [vmem:[%s54 + $0x88] sm:$0xff] %v1239
      %1272 = vst [vmem:[%s54 + $0x90] sm:$0xff] %v1240
      %1273 = vst [vmem:[%s54 + $0x98] sm:$0xff] %v1241
      %1274 = vst [vmem:[%s54 + $0xa0] sm:$0xff] %v1242
      %1275 = vst [vmem:[%s54 + $0xa8] sm:$0xff] %v1243
      %1276 = vst [vmem:[%s54 + $0xb0] sm:$0xff] %v1244
      %1277 = vst [vmem:[%s54 + $0xb8] sm:$0xff] %v1245
      %1278 = vst [vmem:[%s54 + $0xc0] sm:$0xff] %v1246
      %1279 = vst [vmem:[%s54 + $0xc8] sm:$0xff] %v1247
      %1280 = vst [vmem:[%s54 + $0xd0] sm:$0xff] %v1248
      %1281 = vst [vmem:[%s54 + $0xd8] sm:$0xff] %v1249
      %1282 = vst [vmem:[%s54 + $0xe0] sm:$0xff] %v1250
      %1283 = vst [vmem:[%s54 + $0xe8] sm:$0xff] %v1251
      %1284 = vst [vmem:[%s54 + $0xf0] sm:$0xff] %v1252
      %1285 = vst [vmem:[%s54 + $0xf8] sm:$0xff] %v1253
      %p1286 = scmp.lt.s32.totalorder %s13, 1
      %s1287 = scalar_select %p1286, %s13, 1
      %s1288 = smul.addr %s1287, 32
      %s1289 = smul.addr %s1288, 8
      %s1290 = scalar_lea.vmem %s1, %s1289
      // Predicated region
      $region13: #{point_quantizer_forward.3} parent=11 // pred_check
        %p1291 = pneg %p28
      $region14: #{point_quantizer_forward.3} parent=11 // pred_check_branch
        %1293 = sbr.rel (%p1291) target = $region16
      $region15: #{point_quantizer_forward.3} parent=11 // pred_region
        _
      $region16: #{point_quantizer_forward.3} parent=11 // pred_fallthru
        _
    $region12: #{point_quantizer_forward.3} parent=5 // pred_fallthru
      _
    %p1294 = scmp.le.s32.totalorder 1, %s13
    // Predicated region
    $region17: #{point_quantizer_forward.3} parent=5 // pred_check
      %p1295 = pneg %p1294
    $region18: #{point_quantizer_forward.3} parent=5 // pred_check_branch
      %1297 = sbr.rel (%p1295) target = $region20
    $region19: #{point_quantizer_forward.3} parent=5 // pred_region
      %s1298 = ssub.s32 %s13, 1
      // Predicated region
      $region21: #{point_quantizer_forward.3} parent=19 // pred_check
        %p1299 = pneg %p34
      $region22: #{point_quantizer_forward.3} parent=19 // pred_check_branch
        %1301 = sbr.rel (%p1299) target = $region24
      $region23: #{point_quantizer_forward.3} parent=19 // pred_region
        %p1302 = scmp.lt.s32.totalorder %s18, 1
        %s1303 = scalar_select %p1302, %s18, 1
        %s1304 = smul.addr %s1303, 32
        %s1305 = smul.addr %s1304, 8
        %s1306 = scalar_lea.vmem %s1, %s1305
      $region24: #{point_quantizer_forward.3} parent=19 // pred_fallthru
        _
    $region20: #{point_quantizer_forward.3} parent=5 // pred_fallthru
      _
  $region6: #{point_quantizer_forward.3} parent=0 // loop_footer
    %s17 = sadd.s32 1, %s13
  $region7: #{point_quantizer_forward.3} parent=0 // loop_footer_branch
    %12 = sbr.rel target = $region3
  $region8: #{point_quantizer_forward.3} parent=0 // loop_exit
    _

</llo_original>
